<compile_context>
chip_gen: v6e
topology: v6e:2x2x1
jax: 0.10.0
libtpu: 0.0.40
codegen_flags: <defaults>
</compile_context>

<pallas_src>
import functools

import jax
import jax.numpy as jnp
from jax.experimental import pallas as pl
from jax.experimental.pallas import tpu as pltpu

LANE = 128
BIAS_ROWS = 16    # each bias gets a 16-row segment so every slab offset is
                  # aligned to the bf16 (16,128) tile


# ----------------------------- fused Pallas kernel ------------------------- #

def _fused_forward_kernel(x_ref, w_ref, o_ref, xpad_ref, *,
                          S, K, dilations, blk_offsets, mlp_offsets):
    """Whole TCN_Deposit forward (TCN blocks + MLP head) for one batch element.

    x_ref    : (1, S, LANE)  channel-padded embedded inputs (f32).
    w_ref    : (rows, LANE)  single stacked bf16 weight slab; sub-weights are
               addressed with static pl.ds row offsets.
    o_ref    : (1, S, LANE)  lane-dense output tile.
    xpad_ref : (1, S + pad_max, LANE) f32 scratch; rows [0, pad_max) stay zero
               so dilated taps read causal zero padding (== left-pad + chomp).
    """
    lane = x_ref.shape[-1]
    b_blk = x_ref.shape[0]
    rows = b_blk * S
    pad_max = xpad_ref.shape[1] - S

    # Zero only the causal pad rows; the data region is overwritten right after.
    xpad_ref[:, pl.ds(0, pad_max), :] = jnp.zeros((b_blk, pad_max, lane),
                                                  xpad_ref.dtype)
    xpad_ref[:, pl.ds(pad_max, S), :] = x_ref[...]

    cur = x_ref[...].reshape(rows, lane)            # running activation (f32)

    def w_rows(off, n):                             # bf16 (n, LANE) sub-weight
        return w_ref[pl.ds(off, n), :]

    def bias(off):                                  # (1, LANE) f32 bias row
        return w_rows(off, 1).astype(jnp.float32)

    def causal_conv(w_off, b_off, dilation):
        # K accumulating MXU dots (no im2col concat slab).
        pad = (K - 1) * dilation
        acc = jnp.zeros((rows, lane), jnp.float32)
        for k in range(K):
            start = pad_max - pad + k * dilation    # tap k=0 is earliest in time
            tap = xpad_ref[:, pl.ds(start, S), :].reshape(rows, lane)
            acc = acc + jnp.dot(tap.astype(jnp.bfloat16),
                                w_rows(w_off + k * lane, lane),
                                preferred_element_type=jnp.float32)
        return jnp.maximum(acc + bias(b_off), 0.0)  # relu(conv + b)

    n_blocks = len(blk_offsets)
    for li, (d, offs) in enumerate(zip(dilations, blk_offsets)):
        w1o, b1o, w2o, b2o, wdo, bdo = offs
        if wdo is not None:
            # 1x1 residual conv, fused (reads the tile already resident).
            res = jnp.dot(cur.astype(jnp.bfloat16), w_rows(wdo, lane),
                          preferred_element_type=jnp.float32) + bias(bdo)
        else:
            res = cur
        h = causal_conv(w1o, b1o, d)                # relu(conv1 + b1)
        xpad_ref[:, pl.ds(pad_max, S), :] = h.reshape(b_blk, S, lane)
        y = causal_conv(w2o, b2o, d)                # relu(conv2 + b2)
        out = jnp.maximum(y + res, 0.0)             # relu(. + residual)
        if li < n_blocks - 1:                       # only next block reads xpad
            xpad_ref[:, pl.ds(pad_max, S), :] = out.reshape(b_blk, S, lane)
        cur = out

    # --- MLP head: Linear -> ReLU -> (Dropout=identity) -> Linear ---
    flat = cur
    n_mlp = len(mlp_offsets)
    for i, (wo, bo) in enumerate(mlp_offsets):
        flat = jnp.dot(flat.astype(jnp.bfloat16), w_rows(wo, lane),
                       preferred_element_type=jnp.float32) + bias(bo)
        if i < n_mlp - 1:
            flat = jnp.maximum(flat, 0.0)

    o_ref[...] = flat.reshape(b_blk, S, lane).astype(o_ref.dtype)


# ---------------------------- weight lane-padding / packing ----------------- #

def _pad_mat(w, lane=LANE):
    cin, cout = w.shape
    return jnp.pad(w, ((0, lane - cin), (0, lane - cout)))


def _bias_rows(b, lane=LANE):
    out = jnp.zeros((BIAS_ROWS, lane), jnp.float32)
    return out.at[0, :b.shape[0]].set(b)


def _pad_conv_w(w, lane=LANE):
    # (K, Cin, Cout) -> zero-pad channels to 128 and stack taps: (K*128, 128).
    # NOTE: real PyTorch Conv1d weights are (Cout, Cin, K) cross-correlation;
    # when porting a checkpoint transpose to (K, Cin, Cout) and fold weight_norm.
    K, cin, cout = w.shape
    w = jnp.pad(w, ((0, 0), (0, lane - cin), (0, lane - cout)))
    return w.reshape(K * lane, lane)


def pack_weights(weights):
    """Pad all TCN/MLP weights to lane width 128, stack them into ONE bf16 slab
    (single HBM->VMEM DMA) and record static row offsets for in-kernel pl.ds."""
    segs, row = [], 0

    def add(seg):
        nonlocal row
        off = row
        segs.append(seg)
        row += seg.shape[0]
        return off

    blk_offsets = []
    for blk in weights["tcn"]:
        w1o = add(_pad_conv_w(blk["w1"]))
        b1o = add(_bias_rows(blk["b1"]))
        w2o = add(_pad_conv_w(blk["w2"]))
        b2o = add(_bias_rows(blk["b2"]))
        if "wd" in blk:                              # 1x1 downsample conv
            wdo = add(_pad_mat(blk["wd"]))
            bdo = add(_bias_rows(blk["bd"]))
        else:
            wdo = bdo = None
        blk_offsets.append((w1o, b1o, w2o, b2o, wdo, bdo))

    mlp_offsets = []
    for wm, bm in weights["mlp"]:
        mlp_offsets.append((add(_pad_mat(wm)), add(_bias_rows(bm))))

    wslab = jnp.concatenate(segs, axis=0).astype(jnp.bfloat16)
    packed = {"embeds": weights["embeds"], "wslab": wslab}
    layout = (tuple(blk_offsets), tuple(mlp_offsets))
    return packed, layout


# -------------------------- model setup & forward --------------------------- #

PARAMS = {
    "device": "cpu",
    "source_features": ["cat_a", "cat_b", "num_x", "num_y"],
    "features_num": ["num_x", "num_y"],
    "features_cat": ["cat_a", "cat_b"],
    "vocab_lens": {"cat_a": 10, "cat_b": 7},
    "embed_dims": {"cat_a": 4, "cat_b": 3},
    "layers": [16, 16],        # TCN num_channels
    "kernel_size": 3,
    "output_size": 8,
    "in_layers": [16, 12],     # MLP hidden layers (in_layers[0] == layers[-1])
    "dropout_tcn": 0.1,
    "dropout_mlp": 0.7,
}


def init_weights(key, params):
    """Deterministic synthetic parameter init (scaled normal)."""
    keys = iter(jax.random.split(key, 64))
    scale = 0.1
    w = {"embeds": {}, "tcn": [], "mlp": []}

    for f in params["features_cat"]:
        w["embeds"][f] = scale * jax.random.normal(
            next(keys), (params["vocab_lens"][f], params["embed_dims"][f]), jnp.float32)

    tot_embed_dim = sum(params["embed_dims"].values()) + len(params["features_num"])
    K = params["kernel_size"]
    cin = tot_embed_dim
    for cout in params["layers"]:
        blk = {
            "w1": scale * jax.random.normal(next(keys), (K, cin, cout), jnp.float32),
            "b1": scale * jax.random.normal(next(keys), (cout,), jnp.float32),
            "w2": scale * jax.random.normal(next(keys), (K, cout, cout), jnp.float32),
            "b2": scale * jax.random.normal(next(keys), (cout,), jnp.float32),
        }
        if cin != cout:   # 1x1 downsample conv on the residual path
            blk["wd"] = scale * jax.random.normal(next(keys), (cin, cout), jnp.float32)
            blk["bd"] = scale * jax.random.normal(next(keys), (cout,), jnp.float32)
        w["tcn"].append(blk)
        cin = cout

    in_layers = params["in_layers"]
    mlp_dims = list(zip(in_layers, in_layers[1:] + [params["output_size"]]))
    for din, dout in mlp_dims:
        w["mlp"].append((
            scale * jax.random.normal(next(keys), (din, dout), jnp.float32),
            scale * jax.random.normal(next(keys), (dout,), jnp.float32),
        ))
    return w


def tcn_deposit_forward(packed, inputs, *, params, layout):
    B, S, _ = inputs.shape
    blk_offsets, mlp_offsets = layout

    # --- embed_inputs ---
    # TODO(synk): embedding gather/concat/pad stays in plain XLA; a Pallas
    # DMA-gather or one-hot matmul is possible but not worth it at these vocab
    # sizes. nn.Dropout is identity (eval); weight_norm assumed pre-folded.
    feats = []
    for i, f in enumerate(params["source_features"]):
        if f in params["features_cat"]:
            idx = inputs[:, :, i].astype(jnp.int32)   # matches torch .long() for non-negative ids
            feats.append(jnp.take(packed["embeds"][f], idx, axis=0))
        else:
            feats.append(inputs[:, :, i:i + 1].astype(jnp.float32))
    x = jnp.concatenate(feats, axis=2)                          # (B, S, tot_embed_dim)
    x = jnp.pad(x, ((0, 0), (0, 0), (0, LANE - x.shape[-1])))   # lane-dense channels

    K = params["kernel_size"]
    n_blocks = len(blk_offsets)
    dilations = tuple(2 ** i for i in range(n_blocks))
    pad_max = ((K - 1) * dilations[-1] + 7) // 8 * 8            # sublane-aligned pad rows

    kern = functools.partial(
        _fused_forward_kernel, S=S, K=K, dilations=dilations,
        blk_offsets=blk_offsets, mlp_offsets=mlp_offsets)

    wslab = packed["wslab"]
    out = pl.pallas_call(
        kern,
        out_shape=jax.ShapeDtypeStruct((B, S, LANE), jnp.float32),
        grid=(B,),                                              # megacore on v7x
        in_specs=[pl.BlockSpec((1, S, LANE), lambda b: (b, 0, 0)),
                  pl.BlockSpec(wslab.shape, lambda b: (0, 0))], # resident weights
        out_specs=pl.BlockSpec((1, S, LANE), lambda b: (b, 0, 0)),
        scratch_shapes=[pltpu.VMEM((1, S + pad_max, LANE), jnp.float32)],
        compiler_params=pltpu.CompilerParams(
            dimension_semantics=("parallel",)),
    )(x, wslab)

    return out[:, :, :params["output_size"]]


# ---------------------------------- main ------------------------------------ #

if __name__ == "__main__":
    key = jax.random.PRNGKey(0)
    k_w, k_cat_a, k_cat_b, k_num = jax.random.split(key, 4)

    weights = init_weights(k_w, PARAMS)
    packed, layout = pack_weights(weights)      # one-time host-side packing

    B, S = 2, 16
    cat_a = jax.random.randint(k_cat_a, (B, S), 0, PARAMS["vocab_lens"]["cat_a"])
    cat_b = jax.random.randint(k_cat_b, (B, S), 0, PARAMS["vocab_lens"]["cat_b"])
    nums = jax.random.normal(k_num, (B, S, 2), jnp.float32)
    # input tensor mimics the PyTorch float tensor holding int-valued cat columns
    inputs = jnp.concatenate(
        [cat_a[..., None].astype(jnp.float32),
         cat_b[..., None].astype(jnp.float32),
         nums], axis=2)                                   # (2, 16, 4)

    fwd = jax.jit(functools.partial(tcn_deposit_forward, params=PARAMS, layout=layout))
    out = fwd(packed, inputs)                             # (2, 16, 8)
    out = jax.block_until_ready(out)
    assert out.shape == (B, S, PARAMS["output_size"])
    assert jnp.all(jnp.isfinite(out))
    print("KERNEL_OK")
</pallas_src>

<mosaic_0001>
module attributes {stable_mosaic.version = 11 : i64} {
  func.func @_fused_forward_kernel(%arg0: i32, %arg1: memref<1x16x128xf32, #tpu.memory_space<vmem>>, %arg2: memref<2032x128xbf16, #tpu.memory_space<vmem>>, %arg3: memref<1x16x128xf32, #tpu.memory_space<vmem>>, %arg4: memref<1x24x128xf32, #tpu.memory_space<vmem>>) attributes {dimension_semantics = [#tpu.dimension_semantics<parallel>], iteration_bounds = array<i64: 2>, scalar_prefetch = 0 : i64, scratch_operands = 1 : i64, tpu.core_type = #tpu.core_type<tc>, window_params = [{transform_indices = @transform_0, window_bounds = array<i64: 1, 16, 128>}, {pipeline_mode = #tpu.pipeline_mode<synchronous>, transform_indices = @transform_1, window_bounds = array<i64: 2032, 128>}, {transform_indices = @transform_2, window_bounds = array<i64: 1, 16, 128>}]} {
    %cst = arith.constant 0.000000e+00 : f32
    %0 = vector.broadcast %cst : f32 to vector<1x8x128xf32>
    %c0 = arith.constant 0 : index
    %c0_0 = arith.constant 0 : index
    %c0_1 = arith.constant 0 : index
    %1 = vector.load %arg4[%c0, %c0_0, %c0_1] : memref<1x24x128xf32, #tpu.memory_space<vmem>>, vector<1x8x128xf32>
    tpu.vector_store %arg4[%c0, %c0_0, %c0_1], %0 {strides = array<i32>} : memref<1x24x128xf32, #tpu.memory_space<vmem>>, vector<1x8x128xf32>,
    %c0_2 = arith.constant 0 : index
    %c0_3 = arith.constant 0 : index
    %c0_4 = arith.constant 0 : index
    %2 = vector.load %arg1[%c0_2, %c0_3, %c0_4] : memref<1x16x128xf32, #tpu.memory_space<vmem>>, vector<1x16x128xf32>
    %c0_5 = arith.constant 0 : index
    %c8 = arith.constant 8 : index
    %c0_6 = arith.constant 0 : index
    %3 = vector.load %arg4[%c0_5, %c8, %c0_6] : memref<1x24x128xf32, #tpu.memory_space<vmem>>, vector<1x16x128xf32>
    tpu.vector_store %arg4[%c0_5, %c8, %c0_6], %2 {strides = array<i32>} : memref<1x24x128xf32, #tpu.memory_space<vmem>>, vector<1x16x128xf32>,
    %c0_7 = arith.constant 0 : index
    %c0_8 = arith.constant 0 : index
    %c0_9 = arith.constant 0 : index
    %4 = vector.load %arg1[%c0_7, %c0_8, %c0_9] : memref<1x16x128xf32, #tpu.memory_space<vmem>>, vector<1x16x128xf32>
    %5 = vector.shape_cast %4 : vector<1x16x128xf32> to vector<16x128xf32>
    %6 = arith.truncf %5 : vector<16x128xf32> to vector<16x128xbf16>
    %c800 = arith.constant 800 : index
    %c0_10 = arith.constant 0 : index
    %7 = vector.load %arg2[%c800, %c0_10] : memref<2032x128xbf16, #tpu.memory_space<vmem>>, vector<128x128xbf16>
    %cst_11 = arith.constant dense<0.000000e+00> : vector<16x128xf32>
    %8 = tpu.matmul %6, %7, %cst_11 {dimension_numbers = #tpu.dot_dimension_numbers<[1], [0], [0], [1], [0, 0, 1, 1], [], []>} : vector<16x128xbf16>, vector<128x128xbf16>, vector<16x128xf32> -> vector<16x128xf32>
    %c928 = arith.constant 928 : index
    %c0_12 = arith.constant 0 : index
    %9 = vector.load %arg2[%c928, %c0_12] : memref<2032x128xbf16, #tpu.memory_space<vmem>>, vector<1x128xbf16>
    %10 = arith.extf %9 : vector<1x128xbf16> to vector<1x128xf32>
    %11 = vector.broadcast %10 : vector<1x128xf32> to vector<16x128xf32>
    %12 = arith.addf %8, %11 : vector<16x128xf32>
    %cst_13 = arith.constant 0.000000e+00 : f32
    %13 = vector.broadcast %cst_13 : f32 to vector<16x128xf32>
    %c0_14 = arith.constant 0 : index
    %c6 = arith.constant 6 : index
    %c0_15 = arith.constant 0 : index
    %14 = vector.load %arg4[%c0_14, %c6, %c0_15] : memref<1x24x128xf32, #tpu.memory_space<vmem>>, vector<1x16x128xf32>
    %15 = vector.shape_cast %14 : vector<1x16x128xf32> to vector<16x128xf32>
    %16 = arith.truncf %15 : vector<16x128xf32> to vector<16x128xbf16>
    %c0_16 = arith.constant 0 : index
    %c0_17 = arith.constant 0 : index
    %17 = vector.load %arg2[%c0_16, %c0_17] : memref<2032x128xbf16, #tpu.memory_space<vmem>>, vector<128x128xbf16>
    %cst_18 = arith.constant dense<0.000000e+00> : vector<16x128xf32>
    %18 = tpu.matmul %16, %17, %cst_18 {dimension_numbers = #tpu.dot_dimension_numbers<[1], [0], [0], [1], [0, 0, 1, 1], [], []>} : vector<16x128xbf16>, vector<128x128xbf16>, vector<16x128xf32> -> vector<16x128xf32>
    %19 = arith.addf %13, %18 : vector<16x128xf32>
    %c0_19 = arith.constant 0 : index
    %c7 = arith.constant 7 : index
    %c0_20 = arith.constant 0 : index
    %20 = vector.load %arg4[%c0_19, %c7, %c0_20] : memref<1x24x128xf32, #tpu.memory_space<vmem>>, vector<1x16x128xf32>
    %21 = vector.shape_cast %20 : vector<1x16x128xf32> to vector<16x128xf32>
    %22 = arith.truncf %21 : vector<16x128xf32> to vector<16x128xbf16>
    %c128 = arith.constant 128 : index
    %c0_21 = arith.constant 0 : index
    %23 = vector.load %arg2[%c128, %c0_21] : memref<2032x128xbf16, #tpu.memory_space<vmem>>, vector<128x128xbf16>
    %cst_22 = arith.constant dense<0.000000e+00> : vector<16x128xf32>
    %24 = tpu.matmul %22, %23, %cst_22 {dimension_numbers = #tpu.dot_dimension_numbers<[1], [0], [0], [1], [0, 0, 1, 1], [], []>} : vector<16x128xbf16>, vector<128x128xbf16>, vector<16x128xf32> -> vector<16x128xf32>
    %25 = arith.addf %19, %24 : vector<16x128xf32>
    %c0_23 = arith.constant 0 : index
    %c8_24 = arith.constant 8 : index
    %c0_25 = arith.constant 0 : index
    %26 = vector.load %arg4[%c0_23, %c8_24, %c0_25] : memref<1x24x128xf32, #tpu.memory_space<vmem>>, vector<1x16x128xf32>
    %27 = vector.shape_cast %26 : vector<1x16x128xf32> to vector<16x128xf32>
    %28 = arith.truncf %27 : vector<16x128xf32> to vector<16x128xbf16>
    %c256 = arith.constant 256 : index
    %c0_26 = arith.constant 0 : index
    %29 = vector.load %arg2[%c256, %c0_26] : memref<2032x128xbf16, #tpu.memory_space<vmem>>, vector<128x128xbf16>
    %cst_27 = arith.constant dense<0.000000e+00> : vector<16x128xf32>
    %30 = tpu.matmul %28, %29, %cst_27 {dimension_numbers = #tpu.dot_dimension_numbers<[1], [0], [0], [1], [0, 0, 1, 1], [], []>} : vector<16x128xbf16>, vector<128x128xbf16>, vector<16x128xf32> -> vector<16x128xf32>
    %31 = arith.addf %25, %30 : vector<16x128xf32>
    %c384 = arith.constant 384 : index
    %c0_28 = arith.constant 0 : index
    %32 = vector.load %arg2[%c384, %c0_28] : memref<2032x128xbf16, #tpu.memory_space<vmem>>, vector<1x128xbf16>
    %33 = arith.extf %32 : vector<1x128xbf16> to vector<1x128xf32>
    %34 = vector.broadcast %33 : vector<1x128xf32> to vector<16x128xf32>
    %35 = arith.addf %31, %34 : vector<16x128xf32>
    %cst_29 = arith.constant 0.000000e+00 : f32
    %36 = vector.broadcast %cst_29 : f32 to vector<16x128xf32>
    %37 = arith.maximumf %35, %36 : vector<16x128xf32>
    %38 = vector.shape_cast %37 : vector<16x128xf32> to vector<1x16x128xf32>
    %c0_30 = arith.constant 0 : index
    %c8_31 = arith.constant 8 : index
    %c0_32 = arith.constant 0 : index
    %39 = vector.load %arg4[%c0_30, %c8_31, %c0_32] : memref<1x24x128xf32, #tpu.memory_space<vmem>>, vector<1x16x128xf32>
    tpu.vector_store %arg4[%c0_30, %c8_31, %c0_32], %38 {strides = array<i32>} : memref<1x24x128xf32, #tpu.memory_space<vmem>>, vector<1x16x128xf32>,
    %cst_33 = arith.constant 0.000000e+00 : f32
    %40 = vector.broadcast %cst_33 : f32 to vector<16x128xf32>
    %c0_34 = arith.constant 0 : index
    %c6_35 = arith.constant 6 : index
    %c0_36 = arith.constant 0 : index
    %41 = vector.load %arg4[%c0_34, %c6_35, %c0_36] : memref<1x24x128xf32, #tpu.memory_space<vmem>>, vector<1x16x128xf32>
    %42 = vector.shape_cast %41 : vector<1x16x128xf32> to vector<16x128xf32>
    %43 = arith.truncf %42 : vector<16x128xf32> to vector<16x128xbf16>
    %c400 = arith.constant 400 : index
    %c0_37 = arith.constant 0 : index
    %44 = vector.load %arg2[%c400, %c0_37] : memref<2032x128xbf16, #tpu.memory_space<vmem>>, vector<128x128xbf16>
    %cst_38 = arith.constant dense<0.000000e+00> : vector<16x128xf32>
    %45 = tpu.matmul %43, %44, %cst_38 {dimension_numbers = #tpu.dot_dimension_numbers<[1], [0], [0], [1], [0, 0, 1, 1], [], []>} : vector<16x128xbf16>, vector<128x128xbf16>, vector<16x128xf32> -> vector<16x128xf32>
    %46 = arith.addf %40, %45 : vector<16x128xf32>
    %c0_39 = arith.constant 0 : index
    %c7_40 = arith.constant 7 : index
    %c0_41 = arith.constant 0 : index
    %47 = vector.load %arg4[%c0_39, %c7_40, %c0_41] : memref<1x24x128xf32, #tpu.memory_space<vmem>>, vector<1x16x128xf32>
    %48 = vector.shape_cast %47 : vector<1x16x128xf32> to vector<16x128xf32>
    %49 = arith.truncf %48 : vector<16x128xf32> to vector<16x128xbf16>
    %c528 = arith.constant 528 : index
    %c0_42 = arith.constant 0 : index
    %50 = vector.load %arg2[%c528, %c0_42] : memref<2032x128xbf16, #tpu.memory_space<vmem>>, vector<128x128xbf16>
    %cst_43 = arith.constant dense<0.000000e+00> : vector<16x128xf32>
    %51 = tpu.matmul %49, %50, %cst_43 {dimension_numbers = #tpu.dot_dimension_numbers<[1], [0], [0], [1], [0, 0, 1, 1], [], []>} : vector<16x128xbf16>, vector<128x128xbf16>, vector<16x128xf32> -> vector<16x128xf32>
    %52 = arith.addf %46, %51 : vector<16x128xf32>
    %c0_44 = arith.constant 0 : index
    %c8_45 = arith.constant 8 : index
    %c0_46 = arith.constant 0 : index
    %53 = vector.load %arg4[%c0_44, %c8_45, %c0_46] : memref<1x24x128xf32, #tpu.memory_space<vmem>>, vector<1x16x128xf32>
    %54 = vector.shape_cast %53 : vector<1x16x128xf32> to vector<16x128xf32>
    %55 = arith.truncf %54 : vector<16x128xf32> to vector<16x128xbf16>
    %c656 = arith.constant 656 : index
    %c0_47 = arith.constant 0 : index
    %56 = vector.load %arg2[%c656, %c0_47] : memref<2032x128xbf16, #tpu.memory_space<vmem>>, vector<128x128xbf16>
    %cst_48 = arith.constant dense<0.000000e+00> : vector<16x128xf32>
    %57 = tpu.matmul %55, %56, %cst_48 {dimension_numbers = #tpu.dot_dimension_numbers<[1], [0], [0], [1], [0, 0, 1, 1], [], []>} : vector<16x128xbf16>, vector<128x128xbf16>, vector<16x128xf32> -> vector<16x128xf32>
    %58 = arith.addf %52, %57 : vector<16x128xf32>
    %c784 = arith.constant 784 : index
    %c0_49 = arith.constant 0 : index
    %59 = vector.load %arg2[%c784, %c0_49] : memref<2032x128xbf16, #tpu.memory_space<vmem>>, vector<1x128xbf16>
    %60 = arith.extf %59 : vector<1x128xbf16> to vector<1x128xf32>
    %61 = vector.broadcast %60 : vector<1x128xf32> to vector<16x128xf32>
    %62 = arith.addf %58, %61 : vector<16x128xf32>
    %cst_50 = arith.constant 0.000000e+00 : f32
    %63 = vector.broadcast %cst_50 : f32 to vector<16x128xf32>
    %64 = arith.maximumf %62, %63 : vector<16x128xf32>
    %65 = arith.addf %64, %12 : vector<16x128xf32>
    %cst_51 = arith.constant 0.000000e+00 : f32
    %66 = vector.broadcast %cst_51 : f32 to vector<16x128xf32>
    %67 = arith.maximumf %65, %66 : vector<16x128xf32>
    %68 = vector.shape_cast %67 : vector<16x128xf32> to vector<1x16x128xf32>
    %c0_52 = arith.constant 0 : index
    %c8_53 = arith.constant 8 : index
    %c0_54 = arith.constant 0 : index
    %69 = vector.load %arg4[%c0_52, %c8_53, %c0_54] : memref<1x24x128xf32, #tpu.memory_space<vmem>>, vector<1x16x128xf32>
    tpu.vector_store %arg4[%c0_52, %c8_53, %c0_54], %68 {strides = array<i32>} : memref<1x24x128xf32, #tpu.memory_space<vmem>>, vector<1x16x128xf32>,
    %cst_55 = arith.constant 0.000000e+00 : f32
    %70 = vector.broadcast %cst_55 : f32 to vector<16x128xf32>
    %c0_56 = arith.constant 0 : index
    %c4 = arith.constant 4 : index
    %c0_57 = arith.constant 0 : index
    %71 = vector.load %arg4[%c0_56, %c4, %c0_57] : memref<1x24x128xf32, #tpu.memory_space<vmem>>, vector<1x16x128xf32>
    %72 = vector.shape_cast %71 : vector<1x16x128xf32> to vector<16x128xf32>
    %73 = arith.truncf %72 : vector<16x128xf32> to vector<16x128xbf16>
    %c944 = arith.constant 944 : index
    %c0_58 = arith.constant 0 : index
    %74 = vector.load %arg2[%c944, %c0_58] : memref<2032x128xbf16, #tpu.memory_space<vmem>>, vector<128x128xbf16>
    %cst_59 = arith.constant dense<0.000000e+00> : vector<16x128xf32>
    %75 = tpu.matmul %73, %74, %cst_59 {dimension_numbers = #tpu.dot_dimension_numbers<[1], [0], [0], [1], [0, 0, 1, 1], [], []>} : vector<16x128xbf16>, vector<128x128xbf16>, vector<16x128xf32> -> vector<16x128xf32>
    %76 = arith.addf %70, %75 : vector<16x128xf32>
    %c0_60 = arith.constant 0 : index
    %c6_61 = arith.constant 6 : index
    %c0_62 = arith.constant 0 : index
    %77 = vector.load %arg4[%c0_60, %c6_61, %c0_62] : memref<1x24x128xf32, #tpu.memory_space<vmem>>, vector<1x16x128xf32>
    %78 = vector.shape_cast %77 : vector<1x16x128xf32> to vector<16x128xf32>
    %79 = arith.truncf %78 : vector<16x128xf32> to vector<16x128xbf16>
    %c1072 = arith.constant 1072 : index
    %c0_63 = arith.constant 0 : index
    %80 = vector.load %arg2[%c1072, %c0_63] : memref<2032x128xbf16, #tpu.memory_space<vmem>>, vector<128x128xbf16>
    %cst_64 = arith.constant dense<0.000000e+00> : vector<16x128xf32>
    %81 = tpu.matmul %79, %80, %cst_64 {dimension_numbers = #tpu.dot_dimension_numbers<[1], [0], [0], [1], [0, 0, 1, 1], [], []>} : vector<16x128xbf16>, vector<128x128xbf16>, vector<16x128xf32> -> vector<16x128xf32>
    %82 = arith.addf %76, %81 : vector<16x128xf32>
    %c0_65 = arith.constant 0 : index
    %c8_66 = arith.constant 8 : index
    %c0_67 = arith.constant 0 : index
    %83 = vector.load %arg4[%c0_65, %c8_66, %c0_67] : memref<1x24x128xf32, #tpu.memory_space<vmem>>, vector<1x16x128xf32>
    %84 = vector.shape_cast %83 : vector<1x16x128xf32> to vector<16x128xf32>
    %85 = arith.truncf %84 : vector<16x128xf32> to vector<16x128xbf16>
    %c1200 = arith.constant 1200 : index
    %c0_68 = arith.constant 0 : index
    %86 = vector.load %arg2[%c1200, %c0_68] : memref<2032x128xbf16, #tpu.memory_space<vmem>>, vector<128x128xbf16>
    %cst_69 = arith.constant dense<0.000000e+00> : vector<16x128xf32>
    %87 = tpu.matmul %85, %86, %cst_69 {dimension_numbers = #tpu.dot_dimension_numbers<[1], [0], [0], [1], [0, 0, 1, 1], [], []>} : vector<16x128xbf16>, vector<128x128xbf16>, vector<16x128xf32> -> vector<16x128xf32>
    %88 = arith.addf %82, %87 : vector<16x128xf32>
    %c1328 = arith.constant 1328 : index
    %c0_70 = arith.constant 0 : index
    %89 = vector.load %arg2[%c1328, %c0_70] : memref<2032x128xbf16, #tpu.memory_space<vmem>>, vector<1x128xbf16>
    %90 = arith.extf %89 : vector<1x128xbf16> to vector<1x128xf32>
    %91 = vector.broadcast %90 : vector<1x128xf32> to vector<16x128xf32>
    %92 = arith.addf %88, %91 : vector<16x128xf32>
    %cst_71 = arith.constant 0.000000e+00 : f32
    %93 = vector.broadcast %cst_71 : f32 to vector<16x128xf32>
    %94 = arith.maximumf %92, %93 : vector<16x128xf32>
    %95 = vector.shape_cast %94 : vector<16x128xf32> to vector<1x16x128xf32>
    %c0_72 = arith.constant 0 : index
    %c8_73 = arith.constant 8 : index
    %c0_74 = arith.constant 0 : index
    %96 = vector.load %arg4[%c0_72, %c8_73, %c0_74] : memref<1x24x128xf32, #tpu.memory_space<vmem>>, vector<1x16x128xf32>
    tpu.vector_store %arg4[%c0_72, %c8_73, %c0_74], %95 {strides = array<i32>} : memref<1x24x128xf32, #tpu.memory_space<vmem>>, vector<1x16x128xf32>,
    %cst_75 = arith.constant 0.000000e+00 : f32
    %97 = vector.broadcast %cst_75 : f32 to vector<16x128xf32>
    %c0_76 = arith.constant 0 : index
    %c4_77 = arith.constant 4 : index
    %c0_78 = arith.constant 0 : index
    %98 = vector.load %arg4[%c0_76, %c4_77, %c0_78] : memref<1x24x128xf32, #tpu.memory_space<vmem>>, vector<1x16x128xf32>
    %99 = vector.shape_cast %98 : vector<1x16x128xf32> to vector<16x128xf32>
    %100 = arith.truncf %99 : vector<16x128xf32> to vector<16x128xbf16>
    %c1344 = arith.constant 1344 : index
    %c0_79 = arith.constant 0 : index
    %101 = vector.load %arg2[%c1344, %c0_79] : memref<2032x128xbf16, #tpu.memory_space<vmem>>, vector<128x128xbf16>
    %cst_80 = arith.constant dense<0.000000e+00> : vector<16x128xf32>
    %102 = tpu.matmul %100, %101, %cst_80 {dimension_numbers = #tpu.dot_dimension_numbers<[1], [0], [0], [1], [0, 0, 1, 1], [], []>} : vector<16x128xbf16>, vector<128x128xbf16>, vector<16x128xf32> -> vector<16x128xf32>
    %103 = arith.addf %97, %102 : vector<16x128xf32>
    %c0_81 = arith.constant 0 : index
    %c6_82 = arith.constant 6 : index
    %c0_83 = arith.constant 0 : index
    %104 = vector.load %arg4[%c0_81, %c6_82, %c0_83] : memref<1x24x128xf32, #tpu.memory_space<vmem>>, vector<1x16x128xf32>
    %105 = vector.shape_cast %104 : vector<1x16x128xf32> to vector<16x128xf32>
    %106 = arith.truncf %105 : vector<16x128xf32> to vector<16x128xbf16>
    %c1472 = arith.constant 1472 : index
    %c0_84 = arith.constant 0 : index
    %107 = vector.load %arg2[%c1472, %c0_84] : memref<2032x128xbf16, #tpu.memory_space<vmem>>, vector<128x128xbf16>
    %cst_85 = arith.constant dense<0.000000e+00> : vector<16x128xf32>
    %108 = tpu.matmul %106, %107, %cst_85 {dimension_numbers = #tpu.dot_dimension_numbers<[1], [0], [0], [1], [0, 0, 1, 1], [], []>} : vector<16x128xbf16>, vector<128x128xbf16>, vector<16x128xf32> -> vector<16x128xf32>
    %109 = arith.addf %103, %108 : vector<16x128xf32>
    %c0_86 = arith.constant 0 : index
    %c8_87 = arith.constant 8 : index
    %c0_88 = arith.constant 0 : index
    %110 = vector.load %arg4[%c0_86, %c8_87, %c0_88] : memref<1x24x128xf32, #tpu.memory_space<vmem>>, vector<1x16x128xf32>
    %111 = vector.shape_cast %110 : vector<1x16x128xf32> to vector<16x128xf32>
    %112 = arith.truncf %111 : vector<16x128xf32> to vector<16x128xbf16>
    %c1600 = arith.constant 1600 : index
    %c0_89 = arith.constant 0 : index
    %113 = vector.load %arg2[%c1600, %c0_89] : memref<2032x128xbf16, #tpu.memory_space<vmem>>, vector<128x128xbf16>
    %cst_90 = arith.constant dense<0.000000e+00> : vector<16x128xf32>
    %114 = tpu.matmul %112, %113, %cst_90 {dimension_numbers = #tpu.dot_dimension_numbers<[1], [0], [0], [1], [0, 0, 1, 1], [], []>} : vector<16x128xbf16>, vector<128x128xbf16>, vector<16x128xf32> -> vector<16x128xf32>
    %115 = arith.addf %109, %114 : vector<16x128xf32>
    %c1728 = arith.constant 1728 : index
    %c0_91 = arith.constant 0 : index
    %116 = vector.load %arg2[%c1728, %c0_91] : memref<2032x128xbf16, #tpu.memory_space<vmem>>, vector<1x128xbf16>
    %117 = arith.extf %116 : vector<1x128xbf16> to vector<1x128xf32>
    %118 = vector.broadcast %117 : vector<1x128xf32> to vector<16x128xf32>
    %119 = arith.addf %115, %118 : vector<16x128xf32>
    %cst_92 = arith.constant 0.000000e+00 : f32
    %120 = vector.broadcast %cst_92 : f32 to vector<16x128xf32>
    %121 = arith.maximumf %119, %120 : vector<16x128xf32>
    %122 = arith.addf %121, %67 : vector<16x128xf32>
    %cst_93 = arith.constant 0.000000e+00 : f32
    %123 = vector.broadcast %cst_93 : f32 to vector<16x128xf32>
    %124 = arith.maximumf %122, %123 : vector<16x128xf32>
    %125 = arith.truncf %124 : vector<16x128xf32> to vector<16x128xbf16>
    %c1744 = arith.constant 1744 : index
    %c0_94 = arith.constant 0 : index
    %126 = vector.load %arg2[%c1744, %c0_94] : memref<2032x128xbf16, #tpu.memory_space<vmem>>, vector<128x128xbf16>
    %cst_95 = arith.constant dense<0.000000e+00> : vector<16x128xf32>
    %127 = tpu.matmul %125, %126, %cst_95 {dimension_numbers = #tpu.dot_dimension_numbers<[1], [0], [0], [1], [0, 0, 1, 1], [], []>} : vector<16x128xbf16>, vector<128x128xbf16>, vector<16x128xf32> -> vector<16x128xf32>
    %c1872 = arith.constant 1872 : index
    %c0_96 = arith.constant 0 : index
    %128 = vector.load %arg2[%c1872, %c0_96] : memref<2032x128xbf16, #tpu.memory_space<vmem>>, vector<1x128xbf16>
    %129 = arith.extf %128 : vector<1x128xbf16> to vector<1x128xf32>
    %130 = vector.broadcast %129 : vector<1x128xf32> to vector<16x128xf32>
    %131 = arith.addf %127, %130 : vector<16x128xf32>
    %cst_97 = arith.constant 0.000000e+00 : f32
    %132 = vector.broadcast %cst_97 : f32 to vector<16x128xf32>
    %133 = arith.maximumf %131, %132 : vector<16x128xf32>
    %134 = arith.truncf %133 : vector<16x128xf32> to vector<16x128xbf16>
    %c1888 = arith.constant 1888 : index
    %c0_98 = arith.constant 0 : index
    %135 = vector.load %arg2[%c1888, %c0_98] : memref<2032x128xbf16, #tpu.memory_space<vmem>>, vector<128x128xbf16>
    %cst_99 = arith.constant dense<0.000000e+00> : vector<16x128xf32>
    %136 = tpu.matmul %134, %135, %cst_99 {dimension_numbers = #tpu.dot_dimension_numbers<[1], [0], [0], [1], [0, 0, 1, 1], [], []>} : vector<16x128xbf16>, vector<128x128xbf16>, vector<16x128xf32> -> vector<16x128xf32>
    %c2016 = arith.constant 2016 : index
    %c0_100 = arith.constant 0 : index
    %137 = vector.load %arg2[%c2016, %c0_100] : memref<2032x128xbf16, #tpu.memory_space<vmem>>, vector<1x128xbf16>
    %138 = arith.extf %137 : vector<1x128xbf16> to vector<1x128xf32>
    %139 = vector.broadcast %138 : vector<1x128xf32> to vector<16x128xf32>
    %140 = arith.addf %136, %139 : vector<16x128xf32>
    %141 = vector.shape_cast %140 : vector<16x128xf32> to vector<1x16x128xf32>
    %c0_101 = arith.constant 0 : index
    %c0_102 = arith.constant 0 : index
    %c0_103 = arith.constant 0 : index
    %142 = vector.load %arg3[%c0_101, %c0_102, %c0_103] : memref<1x16x128xf32, #tpu.memory_space<vmem>>, vector<1x16x128xf32>
    tpu.vector_store %arg3[%c0_101, %c0_102, %c0_103], %141 {strides = array<i32>} : memref<1x16x128xf32, #tpu.memory_space<vmem>>, vector<1x16x128xf32>,
    return
  }
  func.func @transform_0(%arg0: i32) -> (i32, i32, i32) {
    %c0_i32 = arith.constant 0 : i32
    %c0_i32_0 = arith.constant 0 : i32
    %c0_i32_1 = arith.constant 0 : i32
    return %arg0, %c0_i32, %c0_i32_0 : i32, i32, i32
  }
  func.func @transform_1(%arg0: i32) -> (i32, i32) {
    %c0_i32 = arith.constant 0 : i32
    %c0_i32_0 = arith.constant 0 : i32
    %c0_i32_1 = arith.constant 0 : i32
    return %c0_i32, %c0_i32_0 : i32, i32
  }
  func.func @transform_2(%arg0: i32) -> (i32, i32, i32) {
    %c0_i32 = arith.constant 0 : i32
    %c0_i32_0 = arith.constant 0 : i32
    %c0_i32_1 = arith.constant 0 : i32
    return %arg0, %c0_i32, %c0_i32_0 : i32, i32, i32
  }
}

</mosaic_0001>

<llo_original>
// kernel: tcn_deposit_forward.1
$region0: #{tcn_deposit_forward.1}
  #allocation0 [shape = 'u32[]', space=smem, size = 0x4, offset = 0x4, fixed_abs, tag = 'smem constant byte address 0x4 - core index']
  #allocation1 [shape = 'u32[144,128]{1,0:T(1,128)}', space=vmem, size = 0x12000, scoped, tag = 'internal scratch']
  #allocation2 [shape = 'f32[1,24,128]{2,1,0:T(8,128)}', space=vmem, size = 0x3000, scoped, tag = 'scratch operand']
  %s0 = inlined_call_operand.vmem [shape: f32[2,16,128], index: 0, kind: input, shape index: {}]
  %s1 = inlined_call_operand.hbm [shape: bf16[2032,128], index: 1, kind: input, shape index: {}]
  %s2 = inlined_call_operand.vmem [shape: f32[2,16,128], index: 2, kind: output, shape index: {}]
  %s3 = sld [smem:[#allocation0]]
  $region45: #{tcn_deposit_forward.1} parent=0
    _
  %s5 = ssub.s32 1, %s3
  %s6 = scalar_select 0, %s5, %s3
  $region1: #{tcn_deposit_forward.1} parent=0
    #allocation3 [shape = 'u8[520192]{0}', space=vmem, size = 0x7f000, scoped, tag = 'input window, operand 1, single buffered']
    #allocation4 [shape = 's32[2]{0}', space=sflag, size = 0x8, scoped, tag = 'scoped memory for tcn_deposit_forward.1']
    %7 = vsyncpa [#allocation4], 0
    loop: start=0, step=1, limit=4
    $region2: #{tcn_deposit_forward.1} parent=1 // loop_pre_header
      _
    $region3: #{tcn_deposit_forward.1} parent=1 // loop_header
      %s9 = sphi 0, %s13
      %p10 = scmp.ge.s32.totalorder %s9, 4
      %s19 = sphi 0, %s21
      %s22 = sphi 0, %s19
      %s23 = sphi 0, %s22
      %s39 = sphi 0, %s23
      %s43 = sphi 0, %s43
      %s45 = sphi 0, %s43
      %s46 = sphi 0, %s45
      %s60 = sphi 0, %s46
      %s66 = sphi 0, %s68
      %s69 = sphi 0, %s66
      %s70 = sphi 0, %s69
      %s86 = sphi 0, %s70
    $region4: #{tcn_deposit_forward.1} parent=1 // loop_header_branch
      %12 = sbr.rel (%p10) target = $region8
    $region5: #{tcn_deposit_forward.1} parent=1 // loop_body
      %s14 = ssub.s32 %s9, 1
      %s15 = ssub.s32 %s9, 2
      %s16 = sadd.s32 %s9, 1
      %s17 = ssub.s32 %s9, %s16
      %p18 = scmp.eq.s32.totalorder %s17, 0
      %s20 = sadd.s32 %s19, 1
      %s21 = scalar_select %p18, %s19, %s20
      %p24 = pneg %p18
      %p25 = scmp.eq.s32.totalorder %s9, 1
      %p26 = por %p24, %p25
      %p27 = scmp.ne.s32.totalorder %s19, %s22
      %p28 = scmp.eq.s32.totalorder %s9, 0
      %p29 = por %p27, %p28
      %p30 = scmp.ne.s32.totalorder %s19, %s22
      %p31 = scmp.eq.s32.totalorder %s14, 1
      %p32 = por %p30, %p31
      %p33 = scmp.ne.s32.totalorder %s22, %s23
      %p34 = scmp.eq.s32.totalorder %s14, 0
      %p35 = por %p33, %p34
      %p36 = scmp.ne.s32.totalorder %s22, %s23
      %p37 = scmp.eq.s32.totalorder %s15, 1
      %p38 = por %p36, %p37
      %p40 = scmp.ne.s32.totalorder %s23, %s39
      %p41 = scmp.eq.s32.totalorder %s15, 0
      %p42 = por %p40, %p41
      %s44 = sadd.s32 %s43, 1
      %p47 = scmp.eq.s32.totalorder %s9, 1
      %p48 = scmp.ne.s32.totalorder %s43, %s45
      %p49 = scmp.eq.s32.totalorder %s9, 0
      %p50 = por %p48, %p49
      %p51 = scmp.ne.s32.totalorder %s43, %s45
      %p52 = scmp.eq.s32.totalorder %s14, 1
      %p53 = por %p51, %p52
      %p54 = scmp.ne.s32.totalorder %s45, %s46
      %p55 = scmp.eq.s32.totalorder %s14, 0
      %p56 = por %p54, %p55
      %p57 = scmp.ne.s32.totalorder %s45, %s46
      %p58 = scmp.eq.s32.totalorder %s15, 1
      %p59 = por %p57, %p58
      %p61 = scmp.ne.s32.totalorder %s46, %s60
      %p62 = scmp.eq.s32.totalorder %s15, 0
      %p63 = por %p61, %p62
      %s64 = ssub.s32 %s9, %s16
      %p65 = scmp.eq.s32.totalorder %s64, 0
      %s67 = sadd.s32 %s66, 1
      %s68 = scalar_select %p65, %s66, %s67
      %p71 = pneg %p65
      %p72 = scmp.eq.s32.totalorder %s9, 1
      %p73 = por %p71, %p72
      %p74 = scmp.ne.s32.totalorder %s66, %s69
      %p75 = scmp.eq.s32.totalorder %s9, 0
      %p76 = por %p74, %p75
      %p77 = scmp.ne.s32.totalorder %s66, %s69
      %p78 = scmp.eq.s32.totalorder %s14, 1
      %p79 = por %p77, %p78
      %p80 = scmp.ne.s32.totalorder %s69, %s70
      %p81 = scmp.eq.s32.totalorder %s14, 0
      %p82 = por %p80, %p81
      %p83 = scmp.ne.s32.totalorder %s69, %s70
      %p84 = scmp.eq.s32.totalorder %s15, 1
      %p85 = por %p83, %p84
      %p87 = scmp.ne.s32.totalorder %s70, %s86
      %p88 = scmp.eq.s32.totalorder %s15, 0
      %p89 = por %p87, %p88
      %p90 = scmp.le.s32.totalorder 1, %s9
      %p91 = scmp.lt.s32.totalorder %s9, 3
      %p92 = pnand %p90, %p91
      %p93 = pneg %p92
      // Predicated region
      $region9: #{tcn_deposit_forward.1} parent=5 // pred_check
        _
      $region10: #{tcn_deposit_forward.1} parent=5 // pred_check_branch
        %95 = sbr.rel (%p92) target = $region12
      $region11: #{tcn_deposit_forward.1} parent=5 // pred_region
        %s96 = ssub.s32 %s9, 1
        // Predicated region
        $region13: #{tcn_deposit_forward.1} parent=11 // pred_check
          %p97 = pneg %p56
        $region14: #{tcn_deposit_forward.1} parent=11 // pred_check_branch
          %99 = sbr.rel (%p97) target = $region16
        $region15: #{tcn_deposit_forward.1} parent=11 // pred_region
          %s101 = ssub.s32 16256, 16256
          %102 = vsyncadd [#allocation4], %s101
          %s103 = sshll.u32 [#allocation3], 4
          %s104 = int_to_ptr.vmem [resolvable:$true] %s103
          %109 = dma.hbm_to_vmem [thread:$0]  %s1, 16256, %s104, [#allocation4], 64, 64, 4
        $region16: #{tcn_deposit_forward.1} parent=11 // pred_fallthru
          _
      $region12: #{tcn_deposit_forward.1} parent=5 // pred_fallthru
        _
      %p110 = scmp.lt.s32.totalorder %s9, 2
      // Predicated region
      $region17: #{tcn_deposit_forward.1} parent=5 // pred_check
        %p111 = pneg %p110
      $region18: #{tcn_deposit_forward.1} parent=5 // pred_check_branch
        %113 = sbr.rel (%p111) target = $region20
      $region19: #{tcn_deposit_forward.1} parent=5 // pred_region
        // Predicated region
        $region21: #{tcn_deposit_forward.1} parent=19 // pred_check
          %p114 = pneg %p29
        $region22: #{tcn_deposit_forward.1} parent=19 // pred_check_branch
          %116 = sbr.rel (%p114) target = $region24
        $region23: #{tcn_deposit_forward.1} parent=19 // pred_region
          %p117 = scmp.lt.s32.totalorder %s9, 1
          %s118 = scalar_select %p117, %s9, 1
          %s119 = smul.addr %s118, 2
          %s120 = smul.addr %s119, 8
          %s121 = scalar_lea.vmem %s0, %s120
        $region24: #{tcn_deposit_forward.1} parent=19 // pred_fallthru
          _
      $region20: #{tcn_deposit_forward.1} parent=5 // pred_fallthru
        _
      %p122 = scmp.le.s32.totalorder 1, %s9
      %p123 = scmp.lt.s32.totalorder %s9, 3
      %p124 = pnand %p122, %p123
      %p125 = pneg %p124
      // Predicated region
      $region25: #{tcn_deposit_forward.1} parent=5 // pred_check
        _
      $region26: #{tcn_deposit_forward.1} parent=5 // pred_check_branch
        %127 = sbr.rel (%p124) target = $region28
      $region27: #{tcn_deposit_forward.1} parent=5 // pred_region
        %s128 = ssub.s32 %s9, 1
        // Predicated region
        $region29: #{tcn_deposit_forward.1} parent=27 // pred_check
          %p129 = pneg %p56
        $region30: #{tcn_deposit_forward.1} parent=27 // pred_check_branch
          %131 = sbr.rel (%p129) target = $region32
        $region31: #{tcn_deposit_forward.1} parent=27 // pred_region
          %132 = dma.done [#allocation4], 16256
        $region32: #{tcn_deposit_forward.1} parent=27 // pred_fallthru
          _
        %p133 = scmp.lt.s32.totalorder %s14, 1
        %s134 = scalar_select %p133, %s14, 1
        %s135 = smul.addr %s134, 2
        %s136 = smul.addr %s135, 8
        %s137 = scalar_lea.vmem %s0, %s136
        %p138 = pneg %p35
        %p139 = pneg %p32
        %p140 = pneg %p56
        %p141 = pneg %p53
        %p142 = pneg %p82
        %p143 = pneg %p79
        %p144 = scmp.lt.s32.totalorder %s14, 1
        %s145 = scalar_select %p144, %s14, 1
        %s146 = smul.addr %s145, 2
        %s147 = smul.addr %s146, 8
        %s148 = scalar_lea.vmem %s2, %s147
        %p149 = scmp.lt.s32.totalorder %s14, 1
        %s150 = scalar_select %p149, %s14, 1
        %s151 = smul.addr %s150, 2
        %s152 = smul.addr %s151, 8
        %s153 = scalar_lea.vmem %s0, %s152
        %p154 = scmp.lt.s32.totalorder %s14, 1
        %s155 = scalar_select %p154, %s14, 1
        %s156 = smul.addr %s155, 2
        %s157 = smul.addr %s156, 8
        %s158 = scalar_lea.vmem %s2, %s157
        %160 = vst [vmem:[#allocation2] sm:$0xff] 0.0
        %v161 = vld [vmem:[%s153] sm:$0xff]
        %v162 = vld [vmem:[%s153 + $0x8] sm:$0xff]
        %163 = vst [vmem:[#allocation2 + $0x8] sm:$0xff] %v161
        %164 = vst [vmem:[#allocation2 + $0x10] sm:$0xff] %v162
        %v165 = vld [vmem:[%s153] sm:$0xff]
        %v166 = vld [vmem:[%s153 + $0x8] sm:$0xff]
        %v167 = vpack.c.bf16 %v166, %v165
        %v168 = vld [vmem:[#allocation3 + $0x190] sm:$0xf]
        %v169 = vld [vmem:[#allocation3 + $0x194] sm:$0xf]
        %v170 = vld [vmem:[#allocation3 + $0x198] sm:$0xf]
        %v171 = vld [vmem:[#allocation3 + $0x19c] sm:$0xf]
        %v172 = vld [vmem:[#allocation3 + $0x1a0] sm:$0xf]
        %v173 = vld [vmem:[#allocation3 + $0x1a4] sm:$0xf]
        %v174 = vld [vmem:[#allocation3 + $0x1a8] sm:$0xf]
        %v175 = vld [vmem:[#allocation3 + $0x1ac] sm:$0xf]
        %v176 = vld [vmem:[#allocation3 + $0x1b0] sm:$0xf]
        %v177 = vld [vmem:[#allocation3 + $0x1b4] sm:$0xf]
        %v178 = vld [vmem:[#allocation3 + $0x1b8] sm:$0xf]
        %v179 = vld [vmem:[#allocation3 + $0x1bc] sm:$0xf]
        %v180 = vld [vmem:[#allocation3 + $0x1c0] sm:$0xf]
        %v181 = vld [vmem:[#allocation3 + $0x1c4] sm:$0xf]
        %v182 = vld [vmem:[#allocation3 + $0x1c8] sm:$0xf]
        %v183 = vld [vmem:[#allocation3 + $0x1cc] sm:$0xf]
        %v184 = vld [vmem:[#allocation3 + $0x1d0] sm:$0x1]
        %v185 = vunpack.c.l.bf16 %v184
        %v186 = vlaneseq
        %v187 = vshrl.u32 %v186, 7
        %v188 = vsub.s32 0, %v187
        %v189 = vrot.slane %v185, %v188
        %v206 = vunpack.c.l.b16 %v168
        %v207 = vunpack.c.l.b16 %v169
        %v208 = vunpack.c.l.b16 %v170
        %v209 = vunpack.c.l.b16 %v171
        %v210 = vunpack.c.l.b16 %v172
        %v211 = vunpack.c.l.b16 %v173
        %v212 = vunpack.c.l.b16 %v174
        %v213 = vunpack.c.l.b16 %v175
        %v214 = vunpack.c.l.b16 %v176
        %v215 = vunpack.c.l.b16 %v177
        %v216 = vunpack.c.l.b16 %v178
        %v217 = vunpack.c.l.b16 %v179
        %v218 = vunpack.c.l.b16 %v180
        %v219 = vunpack.c.l.b16 %v181
        %v220 = vunpack.c.l.b16 %v182
        %v221 = vunpack.c.l.b16 %v183
        %v222 = vpack.c.b16 %v207, %v206
        %v223 = vpack.c.b16 %v209, %v208
        %v224 = vpack.c.b16 %v211, %v210
        %v225 = vpack.c.b16 %v213, %v212
        %v226 = vpack.c.b16 %v215, %v214
        %v227 = vpack.c.b16 %v217, %v216
        %v228 = vpack.c.b16 %v219, %v218
        %v229 = vpack.c.b16 %v221, %v220
        %238 = vmatprep.subr.bf16.mxu0 0
        %239 = vmatpush1.bf16.msra.mxu0 %v229
        %240 = vmatprep.subr.bf16.mxu0 0
        %241 = vmatpush1.bf16.msra.mxu0 %v228
        %242 = vmatprep.subr.bf16.mxu0 0
        %243 = vmatpush1.bf16.msra.mxu0 %v227
        %244 = vmatprep.subr.bf16.mxu0 0
        %245 = vmatpush1.bf16.msra.mxu0 %v226
        %246 = vmatprep.subr.bf16.mxu0 0
        %247 = vmatpush1.bf16.msra.mxu0 %v225
        %248 = vmatprep.subr.bf16.mxu0 0
        %249 = vmatpush1.bf16.msra.mxu0 %v224
        %250 = vmatprep.subr.bf16.mxu0 0
        %251 = vmatpush1.bf16.msra.mxu0 %v223
        %252 = vmatprep.subr.bf16.mxu0 0
        %253 = vmatpush1.bf16.msra.mxu0 %v222
        %254 = vmatprep.subr.bf16.mxu0 0
        %255 = vmatpush2.bf16.msra.mxu0 0
        %256 = vmatprep.subr.bf16.mxu0 0
        %257 = vmatpush2.bf16.msra.mxu0 0
        %258 = vmatprep.subr.bf16.mxu0 0
        %259 = vmatpush2.bf16.msra.mxu0 0
        %260 = vmatprep.subr.bf16.mxu0 0
        %261 = vmatpush2.bf16.msra.mxu0 0
        %262 = vmatprep.subr.bf16.mxu0 0
        %263 = vmatpush2.bf16.msra.mxu0 0
        %264 = vmatprep.subr.bf16.mxu0 0
        %265 = vmatpush2.bf16.msra.mxu0 0
        %266 = vmatprep.subr.bf16.mxu0 0
        %267 = vmatpush2.bf16.msra.mxu0 0
        %268 = vmatprep.subr.bf16.mxu0 0
        %269 = vmatpush2.bf16.msra.mxu0 0
        %270 = vmatprep.mubr.bf16.mxu0 0
        %271 = vmatmul.mubr.bf16.gmra.mxu0 %v167
        %v272 = vpop.f32.mrf.mxu0
        %v273 = vadd.f32 %v189, %v272
        %v274 = vpop.f32.mrf.mxu0
        %v275 = vpop.f32.mrf.mxu0
        %v276 = vadd.f32 %v189, %v275
        %v277 = vpop.f32.mrf.mxu0
        %278 = vdwg.mxu0
        %v279 = vld [vmem:[#allocation2 + $0x6] sm:$0xff]
        %v280 = vld [vmem:[#allocation2 + $0xe] sm:$0xff]
        %v281 = vpack.c.bf16 %v280, %v279
        %v282 = vld [vmem:[#allocation3] sm:$0xf]
        %v283 = vld [vmem:[#allocation3 + $0x4] sm:$0xf]
        %v284 = vld [vmem:[#allocation3 + $0x8] sm:$0xf]
        %v285 = vld [vmem:[#allocation3 + $0xc] sm:$0xf]
        %v286 = vld [vmem:[#allocation3 + $0x10] sm:$0xf]
        %v287 = vld [vmem:[#allocation3 + $0x14] sm:$0xf]
        %v288 = vld [vmem:[#allocation3 + $0x18] sm:$0xf]
        %v289 = vld [vmem:[#allocation3 + $0x1c] sm:$0xf]
        %v290 = vld [vmem:[#allocation3 + $0x20] sm:$0xf]
        %v291 = vld [vmem:[#allocation3 + $0x24] sm:$0xf]
        %v292 = vld [vmem:[#allocation3 + $0x28] sm:$0xf]
        %v293 = vld [vmem:[#allocation3 + $0x2c] sm:$0xf]
        %v294 = vld [vmem:[#allocation3 + $0x30] sm:$0xf]
        %v295 = vld [vmem:[#allocation3 + $0x34] sm:$0xf]
        %v296 = vld [vmem:[#allocation3 + $0x38] sm:$0xf]
        %v297 = vld [vmem:[#allocation3 + $0x3c] sm:$0xf]
        %v298 = vld [vmem:[#allocation2 + $0x7] sm:$0xff]
        %v299 = vld [vmem:[#allocation2 + $0xf] sm:$0xff]
        %v300 = vpack.c.bf16 %v299, %v298
        %v301 = vld [vmem:[#allocation3 + $0x40] sm:$0xf]
        %v302 = vld [vmem:[#allocation3 + $0x44] sm:$0xf]
        %v303 = vld [vmem:[#allocation3 + $0x48] sm:$0xf]
        %v304 = vld [vmem:[#allocation3 + $0x4c] sm:$0xf]
        %v305 = vld [vmem:[#allocation3 + $0x50] sm:$0xf]
        %v306 = vld [vmem:[#allocation3 + $0x54] sm:$0xf]
        %v307 = vld [vmem:[#allocation3 + $0x58] sm:$0xf]
        %v308 = vld [vmem:[#allocation3 + $0x5c] sm:$0xf]
        %v309 = vld [vmem:[#allocation3 + $0x60] sm:$0xf]
        %v310 = vld [vmem:[#allocation3 + $0x64] sm:$0xf]
        %v311 = vld [vmem:[#allocation3 + $0x68] sm:$0xf]
        %v312 = vld [vmem:[#allocation3 + $0x6c] sm:$0xf]
        %v313 = vld [vmem:[#allocation3 + $0x70] sm:$0xf]
        %v314 = vld [vmem:[#allocation3 + $0x74] sm:$0xf]
        %v315 = vld [vmem:[#allocation3 + $0x78] sm:$0xf]
        %v316 = vld [vmem:[#allocation3 + $0x7c] sm:$0xf]
        %v333 = vunpack.c.l.b16 %v301
        %v334 = vunpack.c.l.b16 %v302
        %v335 = vunpack.c.l.b16 %v303
        %v336 = vunpack.c.l.b16 %v304
        %v337 = vunpack.c.l.b16 %v305
        %v338 = vunpack.c.l.b16 %v306
        %v339 = vunpack.c.l.b16 %v307
        %v340 = vunpack.c.l.b16 %v308
        %v341 = vunpack.c.l.b16 %v309
        %v342 = vunpack.c.l.b16 %v310
        %v343 = vunpack.c.l.b16 %v311
        %v344 = vunpack.c.l.b16 %v312
        %v345 = vunpack.c.l.b16 %v313
        %v346 = vunpack.c.l.b16 %v314
        %v347 = vunpack.c.l.b16 %v315
        %v348 = vunpack.c.l.b16 %v316
        %v349 = vpack.c.b16 %v334, %v333
        %v350 = vpack.c.b16 %v336, %v335
        %v351 = vpack.c.b16 %v338, %v337
        %v352 = vpack.c.b16 %v340, %v339
        %v353 = vpack.c.b16 %v342, %v341
        %v354 = vpack.c.b16 %v344, %v343
        %v355 = vpack.c.b16 %v346, %v345
        %v356 = vpack.c.b16 %v348, %v347
        %365 = vmatprep.subr.bf16.mxu0 0
        %366 = vmatpush1.bf16.msra.mxu0 %v356
        %367 = vmatprep.subr.bf16.mxu0 0
        %368 = vmatpush1.bf16.msra.mxu0 %v355
        %369 = vmatprep.subr.bf16.mxu0 0
        %370 = vmatpush1.bf16.msra.mxu0 %v354
        %371 = vmatprep.subr.bf16.mxu0 0
        %372 = vmatpush1.bf16.msra.mxu0 %v353
        %373 = vmatprep.subr.bf16.mxu0 0
        %374 = vmatpush1.bf16.msra.mxu0 %v352
        %375 = vmatprep.subr.bf16.mxu0 0
        %376 = vmatpush1.bf16.msra.mxu0 %v351
        %377 = vmatprep.subr.bf16.mxu0 0
        %378 = vmatpush1.bf16.msra.mxu0 %v350
        %379 = vmatprep.subr.bf16.mxu0 0
        %380 = vmatpush1.bf16.msra.mxu0 %v349
        %381 = vmatprep.subr.bf16.mxu0 0
        %382 = vmatpush2.bf16.msra.mxu0 0
        %383 = vmatprep.subr.bf16.mxu0 0
        %384 = vmatpush2.bf16.msra.mxu0 0
        %385 = vmatprep.subr.bf16.mxu0 0
        %386 = vmatpush2.bf16.msra.mxu0 0
        %387 = vmatprep.subr.bf16.mxu0 0
        %388 = vmatpush2.bf16.msra.mxu0 0
        %389 = vmatprep.subr.bf16.mxu0 0
        %390 = vmatpush2.bf16.msra.mxu0 0
        %391 = vmatprep.subr.bf16.mxu0 0
        %392 = vmatpush2.bf16.msra.mxu0 0
        %393 = vmatprep.subr.bf16.mxu0 0
        %394 = vmatpush2.bf16.msra.mxu0 0
        %395 = vmatprep.subr.bf16.mxu0 0
        %396 = vmatpush2.bf16.msra.mxu0 0
        %397 = vmatprep.mubr.bf16.mxu0 0
        %398 = vmatmul.mubr.bf16.gmra.mxu0 %v300
        %v399 = vpop.f32.mrf.mxu0
        %v400 = vadd.f32 0.0, %v399
        %v401 = vpop.f32.mrf.mxu0
        %v402 = vpop.f32.mrf.mxu0
        %v403 = vadd.f32 0.0, %v402
        %v404 = vpop.f32.mrf.mxu0
        %405 = vdwg.mxu0
        %v422 = vunpack.c.l.b16 %v282
        %v423 = vunpack.c.l.b16 %v283
        %v424 = vunpack.c.l.b16 %v284
        %v425 = vunpack.c.l.b16 %v285
        %v426 = vunpack.c.l.b16 %v286
        %v427 = vunpack.c.l.b16 %v287
        %v428 = vunpack.c.l.b16 %v288
        %v429 = vunpack.c.l.b16 %v289
        %v430 = vunpack.c.l.b16 %v290
        %v431 = vunpack.c.l.b16 %v291
        %v432 = vunpack.c.l.b16 %v292
        %v433 = vunpack.c.l.b16 %v293
        %v434 = vunpack.c.l.b16 %v294
        %v435 = vunpack.c.l.b16 %v295
        %v436 = vunpack.c.l.b16 %v296
        %v437 = vunpack.c.l.b16 %v297
        %v438 = vpack.c.b16 %v423, %v422
        %v439 = vpack.c.b16 %v425, %v424
        %v440 = vpack.c.b16 %v427, %v426
        %v441 = vpack.c.b16 %v429, %v428
        %v442 = vpack.c.b16 %v431, %v430
        %v443 = vpack.c.b16 %v433, %v432
        %v444 = vpack.c.b16 %v435, %v434
        %v445 = vpack.c.b16 %v437, %v436
        %454 = vmatprep.subr.bf16.mxu0 0
        %455 = vmatpush1.bf16.msra.mxu0 %v445
        %456 = vmatprep.subr.bf16.mxu0 0
        %457 = vmatpush1.bf16.msra.mxu0 %v444
        %458 = vmatprep.subr.bf16.mxu0 0
        %459 = vmatpush1.bf16.msra.mxu0 %v443
        %460 = vmatprep.subr.bf16.mxu0 0
        %461 = vmatpush1.bf16.msra.mxu0 %v442
        %462 = vmatprep.subr.bf16.mxu0 0
        %463 = vmatpush1.bf16.msra.mxu0 %v441
        %464 = vmatprep.subr.bf16.mxu0 0
        %465 = vmatpush1.bf16.msra.mxu0 %v440
        %466 = vmatprep.subr.bf16.mxu0 0
        %467 = vmatpush1.bf16.msra.mxu0 %v439
        %468 = vmatprep.subr.bf16.mxu0 0
        %469 = vmatpush1.bf16.msra.mxu0 %v438
        %470 = vmatprep.subr.bf16.mxu0 0
        %471 = vmatpush2.bf16.msra.mxu0 0
        %472 = vmatprep.subr.bf16.mxu0 0
        %473 = vmatpush2.bf16.msra.mxu0 0
        %474 = vmatprep.subr.bf16.mxu0 0
        %475 = vmatpush2.bf16.msra.mxu0 0
        %476 = vmatprep.subr.bf16.mxu0 0
        %477 = vmatpush2.bf16.msra.mxu0 0
        %478 = vmatprep.subr.bf16.mxu0 0
        %479 = vmatpush2.bf16.msra.mxu0 0
        %480 = vmatprep.subr.bf16.mxu0 0
        %481 = vmatpush2.bf16.msra.mxu0 0
        %482 = vmatprep.subr.bf16.mxu0 0
        %483 = vmatpush2.bf16.msra.mxu0 0
        %484 = vmatprep.subr.bf16.mxu0 0
        %485 = vmatpush2.bf16.msra.mxu0 0
        %486 = vmatprep.mubr.bf16.mxu0 0
        %487 = vmatmul.mubr.bf16.gmra.mxu0 %v281
        %v488 = vpop.f32.mrf.mxu0
        %v489 = vadd.f32 %v400, %v488
        %v490 = vpop.f32.mrf.mxu0
        %v491 = vpop.f32.mrf.mxu0
        %v492 = vadd.f32 %v403, %v491
        %v493 = vpop.f32.mrf.mxu0
        %494 = vdwg.mxu0
        %v495 = vld [vmem:[#allocation2 + $0x8] sm:$0xff]
        %v496 = vld [vmem:[#allocation2 + $0x10] sm:$0xff]
        %v497 = vpack.c.bf16 %v496, %v495
        %v498 = vld [vmem:[#allocation3 + $0x80] sm:$0xf]
        %v499 = vld [vmem:[#allocation3 + $0x84] sm:$0xf]
        %v500 = vld [vmem:[#allocation3 + $0x88] sm:$0xf]
        %v501 = vld [vmem:[#allocation3 + $0x8c] sm:$0xf]
        %v502 = vld [vmem:[#allocation3 + $0x90] sm:$0xf]
        %v503 = vld [vmem:[#allocation3 + $0x94] sm:$0xf]
        %v504 = vld [vmem:[#allocation3 + $0x98] sm:$0xf]
        %v505 = vld [vmem:[#allocation3 + $0x9c] sm:$0xf]
        %v506 = vld [vmem:[#allocation3 + $0xa0] sm:$0xf]
        %v507 = vld [vmem:[#allocation3 + $0xa4] sm:$0xf]
        %v508 = vld [vmem:[#allocation3 + $0xa8] sm:$0xf]
        %v509 = vld [vmem:[#allocation3 + $0xac] sm:$0xf]
        %v510 = vld [vmem:[#allocation3 + $0xb0] sm:$0xf]
        %v511 = vld [vmem:[#allocation3 + $0xb4] sm:$0xf]
        %v512 = vld [vmem:[#allocation3 + $0xb8] sm:$0xf]
        %v513 = vld [vmem:[#allocation3 + $0xbc] sm:$0xf]
        %v530 = vunpack.c.l.b16 %v498
        %v531 = vunpack.c.l.b16 %v499
        %v532 = vunpack.c.l.b16 %v500
        %v533 = vunpack.c.l.b16 %v501
        %v534 = vunpack.c.l.b16 %v502
        %v535 = vunpack.c.l.b16 %v503
        %v536 = vunpack.c.l.b16 %v504
        %v537 = vunpack.c.l.b16 %v505
        %v538 = vunpack.c.l.b16 %v506
        %v539 = vunpack.c.l.b16 %v507
        %v540 = vunpack.c.l.b16 %v508
        %v541 = vunpack.c.l.b16 %v509
        %v542 = vunpack.c.l.b16 %v510
        %v543 = vunpack.c.l.b16 %v511
        %v544 = vunpack.c.l.b16 %v512
        %v545 = vunpack.c.l.b16 %v513
        %v546 = vpack.c.b16 %v531, %v530
        %v547 = vpack.c.b16 %v533, %v532
        %v548 = vpack.c.b16 %v535, %v534
        %v549 = vpack.c.b16 %v537, %v536
        %v550 = vpack.c.b16 %v539, %v538
        %v551 = vpack.c.b16 %v541, %v540
        %v552 = vpack.c.b16 %v543, %v542
        %v553 = vpack.c.b16 %v545, %v544
        %562 = vmatprep.subr.bf16.mxu0 0
        %563 = vmatpush1.bf16.msra.mxu0 %v553
        %564 = vmatprep.subr.bf16.mxu0 0
        %565 = vmatpush1.bf16.msra.mxu0 %v552
        %566 = vmatprep.subr.bf16.mxu0 0
        %567 = vmatpush1.bf16.msra.mxu0 %v551
        %568 = vmatprep.subr.bf16.mxu0 0
        %569 = vmatpush1.bf16.msra.mxu0 %v550
        %570 = vmatprep.subr.bf16.mxu0 0
        %571 = vmatpush1.bf16.msra.mxu0 %v549
        %572 = vmatprep.subr.bf16.mxu0 0
        %573 = vmatpush1.bf16.msra.mxu0 %v548
        %574 = vmatprep.subr.bf16.mxu0 0
        %575 = vmatpush1.bf16.msra.mxu0 %v547
        %576 = vmatprep.subr.bf16.mxu0 0
        %577 = vmatpush1.bf16.msra.mxu0 %v546
        %578 = vmatprep.subr.bf16.mxu0 0
        %579 = vmatpush2.bf16.msra.mxu0 0
        %580 = vmatprep.subr.bf16.mxu0 0
        %581 = vmatpush2.bf16.msra.mxu0 0
        %582 = vmatprep.subr.bf16.mxu0 0
        %583 = vmatpush2.bf16.msra.mxu0 0
        %584 = vmatprep.subr.bf16.mxu0 0
        %585 = vmatpush2.bf16.msra.mxu0 0
        %586 = vmatprep.subr.bf16.mxu0 0
        %587 = vmatpush2.bf16.msra.mxu0 0
        %588 = vmatprep.subr.bf16.mxu0 0
        %589 = vmatpush2.bf16.msra.mxu0 0
        %590 = vmatprep.subr.bf16.mxu0 0
        %591 = vmatpush2.bf16.msra.mxu0 0
        %592 = vmatprep.subr.bf16.mxu0 0
        %593 = vmatpush2.bf16.msra.mxu0 0
        %594 = vmatprep.mubr.bf16.mxu0 0
        %595 = vmatmul.mubr.bf16.gmra.mxu0 %v497
        %v596 = vpop.f32.mrf.mxu0
        %v597 = vadd.f32 0.0, %v596
        %v598 = vpop.f32.mrf.mxu0
        %v599 = vpop.f32.mrf.mxu0
        %v600 = vadd.f32 0.0, %v599
        %v601 = vpop.f32.mrf.mxu0
        %602 = vdwg.mxu0
        %v603 = vadd.f32 %v489, %v597
        %v604 = vadd.f32 %v492, %v600
        %v605 = vld [vmem:[#allocation3 + $0xc0] sm:$0x1]
        %v606 = vunpack.c.l.bf16 %v605
        %v607 = vlaneseq
        %v608 = vshrl.u32 %v607, 7
        %v609 = vsub.s32 0, %v608
        %v610 = vrot.slane %v606, %v609
        %v611 = vadd.f32 %v603, %v610
        %v612 = vadd.f32 %v604, %v610
        %v613 = vmax.f32 %v611, 0.0
        %v614 = vmax.f32 %v612, 0.0
        %615 = vst [vmem:[#allocation2 + $0x8] sm:$0xff] %v613
        %616 = vst [vmem:[#allocation2 + $0x10] sm:$0xff] %v614
        %v617 = vld [vmem:[#allocation2 + $0x6] sm:$0xff]
        %v618 = vld [vmem:[#allocation2 + $0xe] sm:$0xff]
        %v619 = vpack.c.bf16 %v618, %v617
        %v620 = vld [vmem:[#allocation3 + $0xc8] sm:$0xf]
        %v621 = vld [vmem:[#allocation3 + $0xcc] sm:$0xf]
        %v622 = vld [vmem:[#allocation3 + $0xd0] sm:$0xf]
        %v623 = vld [vmem:[#allocation3 + $0xd4] sm:$0xf]
        %v624 = vld [vmem:[#allocation3 + $0xd8] sm:$0xf]
        %v625 = vld [vmem:[#allocation3 + $0xdc] sm:$0xf]
        %v626 = vld [vmem:[#allocation3 + $0xe0] sm:$0xf]
        %v627 = vld [vmem:[#allocation3 + $0xe4] sm:$0xf]
        %v628 = vld [vmem:[#allocation3 + $0xe8] sm:$0xf]
        %v629 = vld [vmem:[#allocation3 + $0xec] sm:$0xf]
        %v630 = vld [vmem:[#allocation3 + $0xf0] sm:$0xf]
        %v631 = vld [vmem:[#allocation3 + $0xf4] sm:$0xf]
        %v632 = vld [vmem:[#allocation3 + $0xf8] sm:$0xf]
        %v633 = vld [vmem:[#allocation3 + $0xfc] sm:$0xf]
        %v634 = vld [vmem:[#allocation3 + $0x100] sm:$0xf]
        %v635 = vld [vmem:[#allocation3 + $0x104] sm:$0xf]
        %v636 = vld [vmem:[#allocation2 + $0x7] sm:$0xff]
        %v637 = vld [vmem:[#allocation2 + $0xf] sm:$0xff]
        %v638 = vpack.c.bf16 %v637, %v636
        %v639 = vld [vmem:[#allocation3 + $0x108] sm:$0xf]
        %v640 = vld [vmem:[#allocation3 + $0x10c] sm:$0xf]
        %v641 = vld [vmem:[#allocation3 + $0x110] sm:$0xf]
        %v642 = vld [vmem:[#allocation3 + $0x114] sm:$0xf]
        %v643 = vld [vmem:[#allocation3 + $0x118] sm:$0xf]
        %v644 = vld [vmem:[#allocation3 + $0x11c] sm:$0xf]
        %v645 = vld [vmem:[#allocation3 + $0x120] sm:$0xf]
        %v646 = vld [vmem:[#allocation3 + $0x124] sm:$0xf]
        %v647 = vld [vmem:[#allocation3 + $0x128] sm:$0xf]
        %v648 = vld [vmem:[#allocation3 + $0x12c] sm:$0xf]
        %v649 = vld [vmem:[#allocation3 + $0x130] sm:$0xf]
        %v650 = vld [vmem:[#allocation3 + $0x134] sm:$0xf]
        %v651 = vld [vmem:[#allocation3 + $0x138] sm:$0xf]
        %v652 = vld [vmem:[#allocation3 + $0x13c] sm:$0xf]
        %v653 = vld [vmem:[#allocation3 + $0x140] sm:$0xf]
        %v654 = vld [vmem:[#allocation3 + $0x144] sm:$0xf]
        %v671 = vunpack.c.l.b16 %v639
        %v672 = vunpack.c.l.b16 %v640
        %v673 = vunpack.c.l.b16 %v641
        %v674 = vunpack.c.l.b16 %v642
        %v675 = vunpack.c.l.b16 %v643
        %v676 = vunpack.c.l.b16 %v644
        %v677 = vunpack.c.l.b16 %v645
        %v678 = vunpack.c.l.b16 %v646
        %v679 = vunpack.c.l.b16 %v647
        %v680 = vunpack.c.l.b16 %v648
        %v681 = vunpack.c.l.b16 %v649
        %v682 = vunpack.c.l.b16 %v650
        %v683 = vunpack.c.l.b16 %v651
        %v684 = vunpack.c.l.b16 %v652
        %v685 = vunpack.c.l.b16 %v653
        %v686 = vunpack.c.l.b16 %v654
        %v687 = vpack.c.b16 %v672, %v671
        %v688 = vpack.c.b16 %v674, %v673
        %v689 = vpack.c.b16 %v676, %v675
        %v690 = vpack.c.b16 %v678, %v677
        %v691 = vpack.c.b16 %v680, %v679
        %v692 = vpack.c.b16 %v682, %v681
        %v693 = vpack.c.b16 %v684, %v683
        %v694 = vpack.c.b16 %v686, %v685
        %703 = vmatprep.subr.bf16.mxu0 0
        %704 = vmatpush1.bf16.msra.mxu0 %v694
        %705 = vmatprep.subr.bf16.mxu0 0
        %706 = vmatpush1.bf16.msra.mxu0 %v693
        %707 = vmatprep.subr.bf16.mxu0 0
        %708 = vmatpush1.bf16.msra.mxu0 %v692
        %709 = vmatprep.subr.bf16.mxu0 0
        %710 = vmatpush1.bf16.msra.mxu0 %v691
        %711 = vmatprep.subr.bf16.mxu0 0
        %712 = vmatpush1.bf16.msra.mxu0 %v690
        %713 = vmatprep.subr.bf16.mxu0 0
        %714 = vmatpush1.bf16.msra.mxu0 %v689
        %715 = vmatprep.subr.bf16.mxu0 0
        %716 = vmatpush1.bf16.msra.mxu0 %v688
        %717 = vmatprep.subr.bf16.mxu0 0
        %718 = vmatpush1.bf16.msra.mxu0 %v687
        %719 = vmatprep.subr.bf16.mxu0 0
        %720 = vmatpush2.bf16.msra.mxu0 0
        %721 = vmatprep.subr.bf16.mxu0 0
        %722 = vmatpush2.bf16.msra.mxu0 0
        %723 = vmatprep.subr.bf16.mxu0 0
        %724 = vmatpush2.bf16.msra.mxu0 0
        %725 = vmatprep.subr.bf16.mxu0 0
        %726 = vmatpush2.bf16.msra.mxu0 0
        %727 = vmatprep.subr.bf16.mxu0 0
        %728 = vmatpush2.bf16.msra.mxu0 0
        %729 = vmatprep.subr.bf16.mxu0 0
        %730 = vmatpush2.bf16.msra.mxu0 0
        %731 = vmatprep.subr.bf16.mxu0 0
        %732 = vmatpush2.bf16.msra.mxu0 0
        %733 = vmatprep.subr.bf16.mxu0 0
        %734 = vmatpush2.bf16.msra.mxu0 0
        %735 = vmatprep.mubr.bf16.mxu0 0
        %736 = vmatmul.mubr.bf16.gmra.mxu0 %v638
        %v737 = vpop.f32.mrf.mxu0
        %v738 = vadd.f32 0.0, %v737
        %v739 = vpop.f32.mrf.mxu0
        %v740 = vpop.f32.mrf.mxu0
        %v741 = vadd.f32 0.0, %v740
        %v742 = vpop.f32.mrf.mxu0
        %743 = vdwg.mxu0
        %v760 = vunpack.c.l.b16 %v620
        %v761 = vunpack.c.l.b16 %v621
        %v762 = vunpack.c.l.b16 %v622
        %v763 = vunpack.c.l.b16 %v623
        %v764 = vunpack.c.l.b16 %v624
        %v765 = vunpack.c.l.b16 %v625
        %v766 = vunpack.c.l.b16 %v626
        %v767 = vunpack.c.l.b16 %v627
        %v768 = vunpack.c.l.b16 %v628
        %v769 = vunpack.c.l.b16 %v629
        %v770 = vunpack.c.l.b16 %v630
        %v771 = vunpack.c.l.b16 %v631
        %v772 = vunpack.c.l.b16 %v632
        %v773 = vunpack.c.l.b16 %v633
        %v774 = vunpack.c.l.b16 %v634
        %v775 = vunpack.c.l.b16 %v635
        %v776 = vpack.c.b16 %v761, %v760
        %v777 = vpack.c.b16 %v763, %v762
        %v778 = vpack.c.b16 %v765, %v764
        %v779 = vpack.c.b16 %v767, %v766
        %v780 = vpack.c.b16 %v769, %v768
        %v781 = vpack.c.b16 %v771, %v770
        %v782 = vpack.c.b16 %v773, %v772
        %v783 = vpack.c.b16 %v775, %v774
        %792 = vmatprep.subr.bf16.mxu0 0
        %793 = vmatpush1.bf16.msra.mxu0 %v783
        %794 = vmatprep.subr.bf16.mxu0 0
        %795 = vmatpush1.bf16.msra.mxu0 %v782
        %796 = vmatprep.subr.bf16.mxu0 0
        %797 = vmatpush1.bf16.msra.mxu0 %v781
        %798 = vmatprep.subr.bf16.mxu0 0
        %799 = vmatpush1.bf16.msra.mxu0 %v780
        %800 = vmatprep.subr.bf16.mxu0 0
        %801 = vmatpush1.bf16.msra.mxu0 %v779
        %802 = vmatprep.subr.bf16.mxu0 0
        %803 = vmatpush1.bf16.msra.mxu0 %v778
        %804 = vmatprep.subr.bf16.mxu0 0
        %805 = vmatpush1.bf16.msra.mxu0 %v777
        %806 = vmatprep.subr.bf16.mxu0 0
        %807 = vmatpush1.bf16.msra.mxu0 %v776
        %808 = vmatprep.subr.bf16.mxu0 0
        %809 = vmatpush2.bf16.msra.mxu0 0
        %810 = vmatprep.subr.bf16.mxu0 0
        %811 = vmatpush2.bf16.msra.mxu0 0
        %812 = vmatprep.subr.bf16.mxu0 0
        %813 = vmatpush2.bf16.msra.mxu0 0
        %814 = vmatprep.subr.bf16.mxu0 0
        %815 = vmatpush2.bf16.msra.mxu0 0
        %816 = vmatprep.subr.bf16.mxu0 0
        %817 = vmatpush2.bf16.msra.mxu0 0
        %818 = vmatprep.subr.bf16.mxu0 0
        %819 = vmatpush2.bf16.msra.mxu0 0
        %820 = vmatprep.subr.bf16.mxu0 0
        %821 = vmatpush2.bf16.msra.mxu0 0
        %822 = vmatprep.subr.bf16.mxu0 0
        %823 = vmatpush2.bf16.msra.mxu0 0
        %824 = vmatprep.mubr.bf16.mxu0 0
        %825 = vmatmul.mubr.bf16.gmra.mxu0 %v619
        %v826 = vpop.f32.mrf.mxu0
        %v827 = vadd.f32 %v738, %v826
        %v828 = vpop.f32.mrf.mxu0
        %v829 = vpop.f32.mrf.mxu0
        %v830 = vadd.f32 %v741, %v829
        %v831 = vpop.f32.mrf.mxu0
        %832 = vdwg.mxu0
        %v833 = vld [vmem:[#allocation2 + $0x8] sm:$0xff]
        %v834 = vld [vmem:[#allocation2 + $0x10] sm:$0xff]
        %v835 = vpack.c.bf16 %v834, %v833
        %v836 = vld [vmem:[#allocation3 + $0x148] sm:$0xf]
        %v837 = vld [vmem:[#allocation3 + $0x14c] sm:$0xf]
        %v838 = vld [vmem:[#allocation3 + $0x150] sm:$0xf]
        %v839 = vld [vmem:[#allocation3 + $0x154] sm:$0xf]
        %v840 = vld [vmem:[#allocation3 + $0x158] sm:$0xf]
        %v841 = vld [vmem:[#allocation3 + $0x15c] sm:$0xf]
        %v842 = vld [vmem:[#allocation3 + $0x160] sm:$0xf]
        %v843 = vld [vmem:[#allocation3 + $0x164] sm:$0xf]
        %v844 = vld [vmem:[#allocation3 + $0x168] sm:$0xf]
        %v845 = vld [vmem:[#allocation3 + $0x16c] sm:$0xf]
        %v846 = vld [vmem:[#allocation3 + $0x170] sm:$0xf]
        %v847 = vld [vmem:[#allocation3 + $0x174] sm:$0xf]
        %v848 = vld [vmem:[#allocation3 + $0x178] sm:$0xf]
        %v849 = vld [vmem:[#allocation3 + $0x17c] sm:$0xf]
        %v850 = vld [vmem:[#allocation3 + $0x180] sm:$0xf]
        %v851 = vld [vmem:[#allocation3 + $0x184] sm:$0xf]
        %v868 = vunpack.c.l.b16 %v836
        %v869 = vunpack.c.l.b16 %v837
        %v870 = vunpack.c.l.b16 %v838
        %v871 = vunpack.c.l.b16 %v839
        %v872 = vunpack.c.l.b16 %v840
        %v873 = vunpack.c.l.b16 %v841
        %v874 = vunpack.c.l.b16 %v842
        %v875 = vunpack.c.l.b16 %v843
        %v876 = vunpack.c.l.b16 %v844
        %v877 = vunpack.c.l.b16 %v845
        %v878 = vunpack.c.l.b16 %v846
        %v879 = vunpack.c.l.b16 %v847
        %v880 = vunpack.c.l.b16 %v848
        %v881 = vunpack.c.l.b16 %v849
        %v882 = vunpack.c.l.b16 %v850
        %v883 = vunpack.c.l.b16 %v851
        %v884 = vpack.c.b16 %v869, %v868
        %v885 = vpack.c.b16 %v871, %v870
        %v886 = vpack.c.b16 %v873, %v872
        %v887 = vpack.c.b16 %v875, %v874
        %v888 = vpack.c.b16 %v877, %v876
        %v889 = vpack.c.b16 %v879, %v878
        %v890 = vpack.c.b16 %v881, %v880
        %v891 = vpack.c.b16 %v883, %v882
        %900 = vmatprep.subr.bf16.mxu0 0
        %901 = vmatpush1.bf16.msra.mxu0 %v891
        %902 = vmatprep.subr.bf16.mxu0 0
        %903 = vmatpush1.bf16.msra.mxu0 %v890
        %904 = vmatprep.subr.bf16.mxu0 0
        %905 = vmatpush1.bf16.msra.mxu0 %v889
        %906 = vmatprep.subr.bf16.mxu0 0
        %907 = vmatpush1.bf16.msra.mxu0 %v888
        %908 = vmatprep.subr.bf16.mxu0 0
        %909 = vmatpush1.bf16.msra.mxu0 %v887
        %910 = vmatprep.subr.bf16.mxu0 0
        %911 = vmatpush1.bf16.msra.mxu0 %v886
        %912 = vmatprep.subr.bf16.mxu0 0
        %913 = vmatpush1.bf16.msra.mxu0 %v885
        %914 = vmatprep.subr.bf16.mxu0 0
        %915 = vmatpush1.bf16.msra.mxu0 %v884
        %916 = vmatprep.subr.bf16.mxu0 0
        %917 = vmatpush2.bf16.msra.mxu0 0
        %918 = vmatprep.subr.bf16.mxu0 0
        %919 = vmatpush2.bf16.msra.mxu0 0
        %920 = vmatprep.subr.bf16.mxu0 0
        %921 = vmatpush2.bf16.msra.mxu0 0
        %922 = vmatprep.subr.bf16.mxu0 0
        %923 = vmatpush2.bf16.msra.mxu0 0
        %924 = vmatprep.subr.bf16.mxu0 0
        %925 = vmatpush2.bf16.msra.mxu0 0
        %926 = vmatprep.subr.bf16.mxu0 0
        %927 = vmatpush2.bf16.msra.mxu0 0
        %928 = vmatprep.subr.bf16.mxu0 0
        %929 = vmatpush2.bf16.msra.mxu0 0
        %930 = vmatprep.subr.bf16.mxu0 0
        %931 = vmatpush2.bf16.msra.mxu0 0
        %932 = vmatprep.mubr.bf16.mxu0 0
        %933 = vmatmul.mubr.bf16.gmra.mxu0 %v835
        %v934 = vpop.f32.mrf.mxu0
        %v935 = vadd.f32 0.0, %v934
        %v936 = vpop.f32.mrf.mxu0
        %v937 = vpop.f32.mrf.mxu0
        %v938 = vadd.f32 0.0, %v937
        %v939 = vpop.f32.mrf.mxu0
        %940 = vdwg.mxu0
        %v941 = vadd.f32 %v827, %v935
        %v942 = vadd.f32 %v830, %v938
        %v943 = vld [vmem:[#allocation3 + $0x188] sm:$0x1]
        %v944 = vunpack.c.l.bf16 %v943
        %v945 = vlaneseq
        %v946 = vshrl.u32 %v945, 7
        %v947 = vsub.s32 0, %v946
        %v948 = vrot.slane %v944, %v947
        %v949 = vadd.f32 %v941, %v948
        %v950 = vadd.f32 %v942, %v948
        %v951 = vmax.f32 %v949, 0.0
        %v952 = vmax.f32 %v950, 0.0
        %v953 = vadd.f32 %v951, %v273
        %v954 = vadd.f32 %v952, %v276
        %v955 = vmax.f32 %v953, 0.0
        %v956 = vmax.f32 %v954, 0.0
        %957 = vst [vmem:[#allocation2 + $0x8] sm:$0xff] %v955
        %958 = vst [vmem:[#allocation2 + $0x10] sm:$0xff] %v956
        %v959 = vld [vmem:[#allocation2 + $0x4] sm:$0xff]
        %v960 = vld [vmem:[#allocation2 + $0xc] sm:$0xff]
        %v961 = vpack.c.bf16 %v960, %v959
        %v962 = vld [vmem:[#allocation3 + $0x1d8] sm:$0xf]
        %v963 = vld [vmem:[#allocation3 + $0x1dc] sm:$0xf]
        %v964 = vld [vmem:[#allocation3 + $0x1e0] sm:$0xf]
        %v965 = vld [vmem:[#allocation3 + $0x1e4] sm:$0xf]
        %v966 = vld [vmem:[#allocation3 + $0x1e8] sm:$0xf]
        %v967 = vld [vmem:[#allocation3 + $0x1ec] sm:$0xf]
        %v968 = vld [vmem:[#allocation3 + $0x1f0] sm:$0xf]
        %v969 = vld [vmem:[#allocation3 + $0x1f4] sm:$0xf]
        %v970 = vld [vmem:[#allocation3 + $0x1f8] sm:$0xf]
        %v971 = vld [vmem:[#allocation3 + $0x1fc] sm:$0xf]
        %v972 = vld [vmem:[#allocation3 + $0x200] sm:$0xf]
        %v973 = vld [vmem:[#allocation3 + $0x204] sm:$0xf]
        %v974 = vld [vmem:[#allocation3 + $0x208] sm:$0xf]
        %v975 = vld [vmem:[#allocation3 + $0x20c] sm:$0xf]
        %v976 = vld [vmem:[#allocation3 + $0x210] sm:$0xf]
        %v977 = vld [vmem:[#allocation3 + $0x214] sm:$0xf]
        %v978 = vld [vmem:[#allocation2 + $0x6] sm:$0xff]
        %v979 = vld [vmem:[#allocation2 + $0xe] sm:$0xff]
        %v980 = vpack.c.bf16 %v979, %v978
        %v981 = vld [vmem:[#allocation3 + $0x218] sm:$0xf]
        %v982 = vld [vmem:[#allocation3 + $0x21c] sm:$0xf]
        %v983 = vld [vmem:[#allocation3 + $0x220] sm:$0xf]
        %v984 = vld [vmem:[#allocation3 + $0x224] sm:$0xf]
        %v985 = vld [vmem:[#allocation3 + $0x228] sm:$0xf]
        %v986 = vld [vmem:[#allocation3 + $0x22c] sm:$0xf]
        %v987 = vld [vmem:[#allocation3 + $0x230] sm:$0xf]
        %v988 = vld [vmem:[#allocation3 + $0x234] sm:$0xf]
        %v989 = vld [vmem:[#allocation3 + $0x238] sm:$0xf]
        %v990 = vld [vmem:[#allocation3 + $0x23c] sm:$0xf]
        %v991 = vld [vmem:[#allocation3 + $0x240] sm:$0xf]
        %v992 = vld [vmem:[#allocation3 + $0x244] sm:$0xf]
        %v993 = vld [vmem:[#allocation3 + $0x248] sm:$0xf]
        %v994 = vld [vmem:[#allocation3 + $0x24c] sm:$0xf]
        %v995 = vld [vmem:[#allocation3 + $0x250] sm:$0xf]
        %v996 = vld [vmem:[#allocation3 + $0x254] sm:$0xf]
        %v1013 = vunpack.c.l.b16 %v981
        %v1014 = vunpack.c.l.b16 %v982
        %v1015 = vunpack.c.l.b16 %v983
        %v1016 = vunpack.c.l.b16 %v984
        %v1017 = vunpack.c.l.b16 %v985
        %v1018 = vunpack.c.l.b16 %v986
        %v1019 = vunpack.c.l.b16 %v987
        %v1020 = vunpack.c.l.b16 %v988
        %v1021 = vunpack.c.l.b16 %v989
        %v1022 = vunpack.c.l.b16 %v990
        %v1023 = vunpack.c.l.b16 %v991
        %v1024 = vunpack.c.l.b16 %v992
        %v1025 = vunpack.c.l.b16 %v993
        %v1026 = vunpack.c.l.b16 %v994
        %v1027 = vunpack.c.l.b16 %v995
        %v1028 = vunpack.c.l.b16 %v996
        %v1029 = vpack.c.b16 %v1014, %v1013
        %v1030 = vpack.c.b16 %v1016, %v1015
        %v1031 = vpack.c.b16 %v1018, %v1017
        %v1032 = vpack.c.b16 %v1020, %v1019
        %v1033 = vpack.c.b16 %v1022, %v1021
        %v1034 = vpack.c.b16 %v1024, %v1023
        %v1035 = vpack.c.b16 %v1026, %v1025
        %v1036 = vpack.c.b16 %v1028, %v1027
        %1045 = vmatprep.subr.bf16.mxu0 0
        %1046 = vmatpush1.bf16.msra.mxu0 %v1036
        %1047 = vmatprep.subr.bf16.mxu0 0
        %1048 = vmatpush1.bf16.msra.mxu0 %v1035
        %1049 = vmatprep.subr.bf16.mxu0 0
        %1050 = vmatpush1.bf16.msra.mxu0 %v1034
        %1051 = vmatprep.subr.bf16.mxu0 0
        %1052 = vmatpush1.bf16.msra.mxu0 %v1033
        %1053 = vmatprep.subr.bf16.mxu0 0
        %1054 = vmatpush1.bf16.msra.mxu0 %v1032
        %1055 = vmatprep.subr.bf16.mxu0 0
        %1056 = vmatpush1.bf16.msra.mxu0 %v1031
        %1057 = vmatprep.subr.bf16.mxu0 0
        %1058 = vmatpush1.bf16.msra.mxu0 %v1030
        %1059 = vmatprep.subr.bf16.mxu0 0
        %1060 = vmatpush1.bf16.msra.mxu0 %v1029
        %1061 = vmatprep.subr.bf16.mxu0 0
        %1062 = vmatpush2.bf16.msra.mxu0 0
        %1063 = vmatprep.subr.bf16.mxu0 0
        %1064 = vmatpush2.bf16.msra.mxu0 0
        %1065 = vmatprep.subr.bf16.mxu0 0
        %1066 = vmatpush2.bf16.msra.mxu0 0
        %1067 = vmatprep.subr.bf16.mxu0 0
        %1068 = vmatpush2.bf16.msra.mxu0 0
        %1069 = vmatprep.subr.bf16.mxu0 0
        %1070 = vmatpush2.bf16.msra.mxu0 0
        %1071 = vmatprep.subr.bf16.mxu0 0
        %1072 = vmatpush2.bf16.msra.mxu0 0
        %1073 = vmatprep.subr.bf16.mxu0 0
        %1074 = vmatpush2.bf16.msra.mxu0 0
        %1075 = vmatprep.subr.bf16.mxu0 0
        %1076 = vmatpush2.bf16.msra.mxu0 0
        %1077 = vmatprep.mubr.bf16.mxu0 0
        %1078 = vmatmul.mubr.bf16.gmra.mxu0 %v980
        %v1079 = vpop.f32.mrf.mxu0
        %v1080 = vadd.f32 0.0, %v1079
        %v1081 = vpop.f32.mrf.mxu0
        %v1082 = vpop.f32.mrf.mxu0
        %v1083 = vadd.f32 0.0, %v1082
        %v1084 = vpop.f32.mrf.mxu0
        %1085 = vdwg.mxu0
        %v1102 = vunpack.c.l.b16 %v962
        %v1103 = vunpack.c.l.b16 %v963
        %v1104 = vunpack.c.l.b16 %v964
        %v1105 = vunpack.c.l.b16 %v965
        %v1106 = vunpack.c.l.b16 %v966
        %v1107 = vunpack.c.l.b16 %v967
        %v1108 = vunpack.c.l.b16 %v968
        %v1109 = vunpack.c.l.b16 %v969
        %v1110 = vunpack.c.l.b16 %v970
        %v1111 = vunpack.c.l.b16 %v971
        %v1112 = vunpack.c.l.b16 %v972
        %v1113 = vunpack.c.l.b16 %v973
        %v1114 = vunpack.c.l.b16 %v974
        %v1115 = vunpack.c.l.b16 %v975
        %v1116 = vunpack.c.l.b16 %v976
        %v1117 = vunpack.c.l.b16 %v977
        %v1118 = vpack.c.b16 %v1103, %v1102
        %v1119 = vpack.c.b16 %v1105, %v1104
        %v1120 = vpack.c.b16 %v1107, %v1106
        %v1121 = vpack.c.b16 %v1109, %v1108
        %v1122 = vpack.c.b16 %v1111, %v1110
        %v1123 = vpack.c.b16 %v1113, %v1112
        %v1124 = vpack.c.b16 %v1115, %v1114
        %v1125 = vpack.c.b16 %v1117, %v1116
        %1134 = vmatprep.subr.bf16.mxu0 0
        %1135 = vmatpush1.bf16.msra.mxu0 %v1125
        %1136 = vmatprep.subr.bf16.mxu0 0
        %1137 = vmatpush1.bf16.msra.mxu0 %v1124
        %1138 = vmatprep.subr.bf16.mxu0 0
        %1139 = vmatpush1.bf16.msra.mxu0 %v1123
        %1140 = vmatprep.subr.bf16.mxu0 0
        %1141 = vmatpush1.bf16.msra.mxu0 %v1122
        %1142 = vmatprep.subr.bf16.mxu0 0
        %1143 = vmatpush1.bf16.msra.mxu0 %v1121
        %1144 = vmatprep.subr.bf16.mxu0 0
        %1145 = vmatpush1.bf16.msra.mxu0 %v1120
        %1146 = vmatprep.subr.bf16.mxu0 0
        %1147 = vmatpush1.bf16.msra.mxu0 %v1119
        %1148 = vmatprep.subr.bf16.mxu0 0
        %1149 = vmatpush1.bf16.msra.mxu0 %v1118
        %1150 = vmatprep.subr.bf16.mxu0 0
        %1151 = vmatpush2.bf16.msra.mxu0 0
        %1152 = vmatprep.subr.bf16.mxu0 0
        %1153 = vmatpush2.bf16.msra.mxu0 0
        %1154 = vmatprep.subr.bf16.mxu0 0
        %1155 = vmatpush2.bf16.msra.mxu0 0
        %1156 = vmatprep.subr.bf16.mxu0 0
        %1157 = vmatpush2.bf16.msra.mxu0 0
        %1158 = vmatprep.subr.bf16.mxu0 0
        %1159 = vmatpush2.bf16.msra.mxu0 0
        %1160 = vmatprep.subr.bf16.mxu0 0
        %1161 = vmatpush2.bf16.msra.mxu0 0
        %1162 = vmatprep.subr.bf16.mxu0 0
        %1163 = vmatpush2.bf16.msra.mxu0 0
        %1164 = vmatprep.subr.bf16.mxu0 0
        %1165 = vmatpush2.bf16.msra.mxu0 0
        %1166 = vmatprep.mubr.bf16.mxu0 0
        %1167 = vmatmul.mubr.bf16.gmra.mxu0 %v961
        %v1168 = vpop.f32.mrf.mxu0
        %v1169 = vadd.f32 %v1080, %v1168
        %v1170 = vpop.f32.mrf.mxu0
        %v1171 = vpop.f32.mrf.mxu0
        %v1172 = vadd.f32 %v1083, %v1171
        %v1173 = vpop.f32.mrf.mxu0
        %1174 = vdwg.mxu0
        %v1175 = vld [vmem:[#allocation2 + $0x8] sm:$0xff]
        %v1176 = vld [vmem:[#allocation2 + $0x10] sm:$0xff]
        %v1177 = vpack.c.bf16 %v1176, %v1175
        %v1178 = vld [vmem:[#allocation3 + $0x258] sm:$0xf]
        %v1179 = vld [vmem:[#allocation3 + $0x25c] sm:$0xf]
        %v1180 = vld [vmem:[#allocation3 + $0x260] sm:$0xf]
        %v1181 = vld [vmem:[#allocation3 + $0x264] sm:$0xf]
        %v1182 = vld [vmem:[#allocation3 + $0x268] sm:$0xf]
        %v1183 = vld [vmem:[#allocation3 + $0x26c] sm:$0xf]
        %v1184 = vld [vmem:[#allocation3 + $0x270] sm:$0xf]
        %v1185 = vld [vmem:[#allocation3 + $0x274] sm:$0xf]
        %v1186 = vld [vmem:[#allocation3 + $0x278] sm:$0xf]
        %v1187 = vld [vmem:[#allocation3 + $0x27c] sm:$0xf]
        %v1188 = vld [vmem:[#allocation3 + $0x280] sm:$0xf]
        %v1189 = vld [vmem:[#allocation3 + $0x284] sm:$0xf]
        %v1190 = vld [vmem:[#allocation3 + $0x288] sm:$0xf]
        %v1191 = vld [vmem:[#allocation3 + $0x28c] sm:$0xf]
        %v1192 = vld [vmem:[#allocation3 + $0x290] sm:$0xf]
        %v1193 = vld [vmem:[#allocation3 + $0x294] sm:$0xf]
        %v1210 = vunpack.c.l.b16 %v1178
        %v1211 = vunpack.c.l.b16 %v1179
        %v1212 = vunpack.c.l.b16 %v1180
        %v1213 = vunpack.c.l.b16 %v1181
        %v1214 = vunpack.c.l.b16 %v1182
        %v1215 = vunpack.c.l.b16 %v1183
        %v1216 = vunpack.c.l.b16 %v1184
        %v1217 = vunpack.c.l.b16 %v1185
        %v1218 = vunpack.c.l.b16 %v1186
        %v1219 = vunpack.c.l.b16 %v1187
        %v1220 = vunpack.c.l.b16 %v1188
        %v1221 = vunpack.c.l.b16 %v1189
        %v1222 = vunpack.c.l.b16 %v1190
        %v1223 = vunpack.c.l.b16 %v1191
        %v1224 = vunpack.c.l.b16 %v1192
        %v1225 = vunpack.c.l.b16 %v1193
        %v1226 = vpack.c.b16 %v1211, %v1210
        %v1227 = vpack.c.b16 %v1213, %v1212
        %v1228 = vpack.c.b16 %v1215, %v1214
        %v1229 = vpack.c.b16 %v1217, %v1216
        %v1230 = vpack.c.b16 %v1219, %v1218
        %v1231 = vpack.c.b16 %v1221, %v1220
        %v1232 = vpack.c.b16 %v1223, %v1222
        %v1233 = vpack.c.b16 %v1225, %v1224
        %1242 = vmatprep.subr.bf16.mxu0 0
        %1243 = vmatpush1.bf16.msra.mxu0 %v1233
        %1244 = vmatprep.subr.bf16.mxu0 0
        %1245 = vmatpush1.bf16.msra.mxu0 %v1232
        %1246 = vmatprep.subr.bf16.mxu0 0
        %1247 = vmatpush1.bf16.msra.mxu0 %v1231
        %1248 = vmatprep.subr.bf16.mxu0 0
        %1249 = vmatpush1.bf16.msra.mxu0 %v1230
        %1250 = vmatprep.subr.bf16.mxu0 0
        %1251 = vmatpush1.bf16.msra.mxu0 %v1229
        %1252 = vmatprep.subr.bf16.mxu0 0
        %1253 = vmatpush1.bf16.msra.mxu0 %v1228
        %1254 = vmatprep.subr.bf16.mxu0 0
        %1255 = vmatpush1.bf16.msra.mxu0 %v1227
        %1256 = vmatprep.subr.bf16.mxu0 0
        %1257 = vmatpush1.bf16.msra.mxu0 %v1226
        %1258 = vmatprep.subr.bf16.mxu0 0
        %1259 = vmatpush2.bf16.msra.mxu0 0
        %1260 = vmatprep.subr.bf16.mxu0 0
        %1261 = vmatpush2.bf16.msra.mxu0 0
        %1262 = vmatprep.subr.bf16.mxu0 0
        %1263 = vmatpush2.bf16.msra.mxu0 0
        %1264 = vmatprep.subr.bf16.mxu0 0
        %1265 = vmatpush2.bf16.msra.mxu0 0
        %1266 = vmatprep.subr.bf16.mxu0 0
        %1267 = vmatpush2.bf16.msra.mxu0 0
        %1268 = vmatprep.subr.bf16.mxu0 0
        %1269 = vmatpush2.bf16.msra.mxu0 0
        %1270 = vmatprep.subr.bf16.mxu0 0
        %1271 = vmatpush2.bf16.msra.mxu0 0
        %1272 = vmatprep.subr.bf16.mxu0 0
        %1273 = vmatpush2.bf16.msra.mxu0 0
        %1274 = vmatprep.mubr.bf16.mxu0 0
        %1275 = vmatmul.mubr.bf16.gmra.mxu0 %v1177
        %v1276 = vpop.f32.mrf.mxu0
        %v1277 = vadd.f32 0.0, %v1276
        %v1278 = vpop.f32.mrf.mxu0
        %v1279 = vpop.f32.mrf.mxu0
        %v1280 = vadd.f32 0.0, %v1279
        %v1281 = vpop.f32.mrf.mxu0
        %1282 = vdwg.mxu0
        %v1283 = vadd.f32 %v1169, %v1277
        %v1284 = vadd.f32 %v1172, %v1280
        %v1285 = vld [vmem:[#allocation3 + $0x298] sm:$0x1]
        %v1286 = vunpack.c.l.bf16 %v1285
        %v1287 = vlaneseq
        %v1288 = vshrl.u32 %v1287, 7
        %v1289 = vsub.s32 0, %v1288
        %v1290 = vrot.slane %v1286, %v1289
        %v1291 = vadd.f32 %v1283, %v1290
        %v1292 = vadd.f32 %v1284, %v1290
        %v1293 = vmax.f32 %v1291, 0.0
        %v1294 = vmax.f32 %v1292, 0.0
        %1295 = vst [vmem:[#allocation2 + $0x8] sm:$0xff] %v1293
        %1296 = vst [vmem:[#allocation2 + $0x10] sm:$0xff] %v1294
        %v1297 = vld [vmem:[#allocation2 + $0x4] sm:$0xff]
        %v1298 = vld [vmem:[#allocation2 + $0xc] sm:$0xff]
        %v1299 = vpack.c.bf16 %v1298, %v1297
        %v1300 = vld [vmem:[#allocation3 + $0x2a0] sm:$0xf]
        %v1301 = vld [vmem:[#allocation3 + $0x2a4] sm:$0xf]
        %v1302 = vld [vmem:[#allocation3 + $0x2a8] sm:$0xf]
        %v1303 = vld [vmem:[#allocation3 + $0x2ac] sm:$0xf]
        %v1304 = vld [vmem:[#allocation3 + $0x2b0] sm:$0xf]
        %v1305 = vld [vmem:[#allocation3 + $0x2b4] sm:$0xf]
        %v1306 = vld [vmem:[#allocation3 + $0x2b8] sm:$0xf]
        %v1307 = vld [vmem:[#allocation3 + $0x2bc] sm:$0xf]
        %v1308 = vld [vmem:[#allocation3 + $0x2c0] sm:$0xf]
        %v1309 = vld [vmem:[#allocation3 + $0x2c4] sm:$0xf]
        %v1310 = vld [vmem:[#allocation3 + $0x2c8] sm:$0xf]
        %v1311 = vld [vmem:[#allocation3 + $0x2cc] sm:$0xf]
        %v1312 = vld [vmem:[#allocation3 + $0x2d0] sm:$0xf]
        %v1313 = vld [vmem:[#allocation3 + $0x2d4] sm:$0xf]
        %v1314 = vld [vmem:[#allocation3 + $0x2d8] sm:$0xf]
        %v1315 = vld [vmem:[#allocation3 + $0x2dc] sm:$0xf]
        %v1316 = vld [vmem:[#allocation2 + $0x6] sm:$0xff]
        %v1317 = vld [vmem:[#allocation2 + $0xe] sm:$0xff]
        %v1318 = vpack.c.bf16 %v1317, %v1316
        %v1319 = vld [vmem:[#allocation3 + $0x2e0] sm:$0xf]
        %v1320 = vld [vmem:[#allocation3 + $0x2e4] sm:$0xf]
        %v1321 = vld [vmem:[#allocation3 + $0x2e8] sm:$0xf]
        %v1322 = vld [vmem:[#allocation3 + $0x2ec] sm:$0xf]
        %v1323 = vld [vmem:[#allocation3 + $0x2f0] sm:$0xf]
        %v1324 = vld [vmem:[#allocation3 + $0x2f4] sm:$0xf]
        %v1325 = vld [vmem:[#allocation3 + $0x2f8] sm:$0xf]
        %v1326 = vld [vmem:[#allocation3 + $0x2fc] sm:$0xf]
        %v1327 = vld [vmem:[#allocation3 + $0x300] sm:$0xf]
        %v1328 = vld [vmem:[#allocation3 + $0x304] sm:$0xf]
        %v1329 = vld [vmem:[#allocation3 + $0x308] sm:$0xf]
        %v1330 = vld [vmem:[#allocation3 + $0x30c] sm:$0xf]
        %v1331 = vld [vmem:[#allocation3 + $0x310] sm:$0xf]
        %v1332 = vld [vmem:[#allocation3 + $0x314] sm:$0xf]
        %v1333 = vld [vmem:[#allocation3 + $0x318] sm:$0xf]
        %v1334 = vld [vmem:[#allocation3 + $0x31c] sm:$0xf]
        %v1351 = vunpack.c.l.b16 %v1319
        %v1352 = vunpack.c.l.b16 %v1320
        %v1353 = vunpack.c.l.b16 %v1321
        %v1354 = vunpack.c.l.b16 %v1322
        %v1355 = vunpack.c.l.b16 %v1323
        %v1356 = vunpack.c.l.b16 %v1324
        %v1357 = vunpack.c.l.b16 %v1325
        %v1358 = vunpack.c.l.b16 %v1326
        %v1359 = vunpack.c.l.b16 %v1327
        %v1360 = vunpack.c.l.b16 %v1328
        %v1361 = vunpack.c.l.b16 %v1329
        %v1362 = vunpack.c.l.b16 %v1330
        %v1363 = vunpack.c.l.b16 %v1331
        %v1364 = vunpack.c.l.b16 %v1332
        %v1365 = vunpack.c.l.b16 %v1333
        %v1366 = vunpack.c.l.b16 %v1334
        %v1367 = vpack.c.b16 %v1352, %v1351
        %v1368 = vpack.c.b16 %v1354, %v1353
        %v1369 = vpack.c.b16 %v1356, %v1355
        %v1370 = vpack.c.b16 %v1358, %v1357
        %v1371 = vpack.c.b16 %v1360, %v1359
        %v1372 = vpack.c.b16 %v1362, %v1361
        %v1373 = vpack.c.b16 %v1364, %v1363
        %v1374 = vpack.c.b16 %v1366, %v1365
        %1383 = vmatprep.subr.bf16.mxu0 0
        %1384 = vmatpush1.bf16.msra.mxu0 %v1374
        %1385 = vmatprep.subr.bf16.mxu0 0
        %1386 = vmatpush1.bf16.msra.mxu0 %v1373
        %1387 = vmatprep.subr.bf16.mxu0 0
        %1388 = vmatpush1.bf16.msra.mxu0 %v1372
        %1389 = vmatprep.subr.bf16.mxu0 0
        %1390 = vmatpush1.bf16.msra.mxu0 %v1371
        %1391 = vmatprep.subr.bf16.mxu0 0
        %1392 = vmatpush1.bf16.msra.mxu0 %v1370
        %1393 = vmatprep.subr.bf16.mxu0 0
        %1394 = vmatpush1.bf16.msra.mxu0 %v1369
        %1395 = vmatprep.subr.bf16.mxu0 0
        %1396 = vmatpush1.bf16.msra.mxu0 %v1368
        %1397 = vmatprep.subr.bf16.mxu0 0
        %1398 = vmatpush1.bf16.msra.mxu0 %v1367
        %1399 = vmatprep.subr.bf16.mxu0 0
        %1400 = vmatpush2.bf16.msra.mxu0 0
        %1401 = vmatprep.subr.bf16.mxu0 0
        %1402 = vmatpush2.bf16.msra.mxu0 0
        %1403 = vmatprep.subr.bf16.mxu0 0
        %1404 = vmatpush2.bf16.msra.mxu0 0
        %1405 = vmatprep.subr.bf16.mxu0 0
        %1406 = vmatpush2.bf16.msra.mxu0 0
        %1407 = vmatprep.subr.bf16.mxu0 0
        %1408 = vmatpush2.bf16.msra.mxu0 0
        %1409 = vmatprep.subr.bf16.mxu0 0
        %1410 = vmatpush2.bf16.msra.mxu0 0
        %1411 = vmatprep.subr.bf16.mxu0 0
        %1412 = vmatpush2.bf16.msra.mxu0 0
        %1413 = vmatprep.subr.bf16.mxu0 0
        %1414 = vmatpush2.bf16.msra.mxu0 0
        %1415 = vmatprep.mubr.bf16.mxu0 0
        %1416 = vmatmul.mubr.bf16.gmra.mxu0 %v1318
        %v1417 = vpop.f32.mrf.mxu0
        %v1418 = vadd.f32 0.0, %v1417
        %v1419 = vpop.f32.mrf.mxu0
        %v1420 = vpop.f32.mrf.mxu0
        %v1421 = vadd.f32 0.0, %v1420
        %v1422 = vpop.f32.mrf.mxu0
        %1423 = vdwg.mxu0
        %v1440 = vunpack.c.l.b16 %v1300
        %v1441 = vunpack.c.l.b16 %v1301
        %v1442 = vunpack.c.l.b16 %v1302
        %v1443 = vunpack.c.l.b16 %v1303
        %v1444 = vunpack.c.l.b16 %v1304
        %v1445 = vunpack.c.l.b16 %v1305
        %v1446 = vunpack.c.l.b16 %v1306
        %v1447 = vunpack.c.l.b16 %v1307
        %v1448 = vunpack.c.l.b16 %v1308
        %v1449 = vunpack.c.l.b16 %v1309
        %v1450 = vunpack.c.l.b16 %v1310
        %v1451 = vunpack.c.l.b16 %v1311
        %v1452 = vunpack.c.l.b16 %v1312
        %v1453 = vunpack.c.l.b16 %v1313
        %v1454 = vunpack.c.l.b16 %v1314
        %v1455 = vunpack.c.l.b16 %v1315
        %v1456 = vpack.c.b16 %v1441, %v1440
        %v1457 = vpack.c.b16 %v1443, %v1442
        %v1458 = vpack.c.b16 %v1445, %v1444
        %v1459 = vpack.c.b16 %v1447, %v1446
        %v1460 = vpack.c.b16 %v1449, %v1448
        %v1461 = vpack.c.b16 %v1451, %v1450
        %v1462 = vpack.c.b16 %v1453, %v1452
        %v1463 = vpack.c.b16 %v1455, %v1454
        %1472 = vmatprep.subr.bf16.mxu0 0
        %1473 = vmatpush1.bf16.msra.mxu0 %v1463
        %1474 = vmatprep.subr.bf16.mxu0 0
        %1475 = vmatpush1.bf16.msra.mxu0 %v1462
        %1476 = vmatprep.subr.bf16.mxu0 0
        %1477 = vmatpush1.bf16.msra.mxu0 %v1461
        %1478 = vmatprep.subr.bf16.mxu0 0
        %1479 = vmatpush1.bf16.msra.mxu0 %v1460
        %1480 = vmatprep.subr.bf16.mxu0 0
        %1481 = vmatpush1.bf16.msra.mxu0 %v1459
        %1482 = vmatprep.subr.bf16.mxu0 0
        %1483 = vmatpush1.bf16.msra.mxu0 %v1458
        %1484 = vmatprep.subr.bf16.mxu0 0
        %1485 = vmatpush1.bf16.msra.mxu0 %v1457
        %1486 = vmatprep.subr.bf16.mxu0 0
        %1487 = vmatpush1.bf16.msra.mxu0 %v1456
        %1488 = vmatprep.subr.bf16.mxu0 0
        %1489 = vmatpush2.bf16.msra.mxu0 0
        %1490 = vmatprep.subr.bf16.mxu0 0
        %1491 = vmatpush2.bf16.msra.mxu0 0
        %1492 = vmatprep.subr.bf16.mxu0 0
        %1493 = vmatpush2.bf16.msra.mxu0 0
        %1494 = vmatprep.subr.bf16.mxu0 0
        %1495 = vmatpush2.bf16.msra.mxu0 0
        %1496 = vmatprep.subr.bf16.mxu0 0
        %1497 = vmatpush2.bf16.msra.mxu0 0
        %1498 = vmatprep.subr.bf16.mxu0 0
        %1499 = vmatpush2.bf16.msra.mxu0 0
        %1500 = vmatprep.subr.bf16.mxu0 0
        %1501 = vmatpush2.bf16.msra.mxu0 0
        %1502 = vmatprep.subr.bf16.mxu0 0
        %1503 = vmatpush2.bf16.msra.mxu0 0
        %1504 = vmatprep.mubr.bf16.mxu0 0
        %1505 = vmatmul.mubr.bf16.gmra.mxu0 %v1299
        %v1506 = vpop.f32.mrf.mxu0
        %v1507 = vadd.f32 %v1418, %v1506
        %v1508 = vpop.f32.mrf.mxu0
        %v1509 = vpop.f32.mrf.mxu0
        %v1510 = vadd.f32 %v1421, %v1509
        %v1511 = vpop.f32.mrf.mxu0
        %1512 = vdwg.mxu0
        %v1513 = vld [vmem:[#allocation2 + $0x8] sm:$0xff]
        %v1514 = vld [vmem:[#allocation2 + $0x10] sm:$0xff]
        %v1515 = vpack.c.bf16 %v1514, %v1513
        %v1516 = vld [vmem:[#allocation3 + $0x320] sm:$0xf]
        %v1517 = vld [vmem:[#allocation3 + $0x324] sm:$0xf]
        %v1518 = vld [vmem:[#allocation3 + $0x328] sm:$0xf]
        %v1519 = vld [vmem:[#allocation3 + $0x32c] sm:$0xf]
        %v1520 = vld [vmem:[#allocation3 + $0x330] sm:$0xf]
        %v1521 = vld [vmem:[#allocation3 + $0x334] sm:$0xf]
        %v1522 = vld [vmem:[#allocation3 + $0x338] sm:$0xf]
        %v1523 = vld [vmem:[#allocation3 + $0x33c] sm:$0xf]
        %v1524 = vld [vmem:[#allocation3 + $0x340] sm:$0xf]
        %v1525 = vld [vmem:[#allocation3 + $0x344] sm:$0xf]
        %v1526 = vld [vmem:[#allocation3 + $0x348] sm:$0xf]
        %v1527 = vld [vmem:[#allocation3 + $0x34c] sm:$0xf]
        %v1528 = vld [vmem:[#allocation3 + $0x350] sm:$0xf]
        %v1529 = vld [vmem:[#allocation3 + $0x354] sm:$0xf]
        %v1530 = vld [vmem:[#allocation3 + $0x358] sm:$0xf]
        %v1531 = vld [vmem:[#allocation3 + $0x35c] sm:$0xf]
        %v1548 = vunpack.c.l.b16 %v1516
        %v1549 = vunpack.c.l.b16 %v1517
        %v1550 = vunpack.c.l.b16 %v1518
        %v1551 = vunpack.c.l.b16 %v1519
        %v1552 = vunpack.c.l.b16 %v1520
        %v1553 = vunpack.c.l.b16 %v1521
        %v1554 = vunpack.c.l.b16 %v1522
        %v1555 = vunpack.c.l.b16 %v1523
        %v1556 = vunpack.c.l.b16 %v1524
        %v1557 = vunpack.c.l.b16 %v1525
        %v1558 = vunpack.c.l.b16 %v1526
        %v1559 = vunpack.c.l.b16 %v1527
        %v1560 = vunpack.c.l.b16 %v1528
        %v1561 = vunpack.c.l.b16 %v1529
        %v1562 = vunpack.c.l.b16 %v1530
        %v1563 = vunpack.c.l.b16 %v1531
        %v1564 = vpack.c.b16 %v1549, %v1548
        %v1565 = vpack.c.b16 %v1551, %v1550
        %v1566 = vpack.c.b16 %v1553, %v1552
        %v1567 = vpack.c.b16 %v1555, %v1554
        %v1568 = vpack.c.b16 %v1557, %v1556
        %v1569 = vpack.c.b16 %v1559, %v1558
        %v1570 = vpack.c.b16 %v1561, %v1560
        %v1571 = vpack.c.b16 %v1563, %v1562
        %1580 = vmatprep.subr.bf16.mxu0 0
        %1581 = vmatpush1.bf16.msra.mxu0 %v1571
        %1582 = vmatprep.subr.bf16.mxu0 0
        %1583 = vmatpush1.bf16.msra.mxu0 %v1570
        %1584 = vmatprep.subr.bf16.mxu0 0
        %1585 = vmatpush1.bf16.msra.mxu0 %v1569
        %1586 = vmatprep.subr.bf16.mxu0 0
        %1587 = vmatpush1.bf16.msra.mxu0 %v1568
        %1588 = vmatprep.subr.bf16.mxu0 0
        %1589 = vmatpush1.bf16.msra.mxu0 %v1567
        %1590 = vmatprep.subr.bf16.mxu0 0
        %1591 = vmatpush1.bf16.msra.mxu0 %v1566
        %1592 = vmatprep.subr.bf16.mxu0 0
        %1593 = vmatpush1.bf16.msra.mxu0 %v1565
        %1594 = vmatprep.subr.bf16.mxu0 0
        %1595 = vmatpush1.bf16.msra.mxu0 %v1564
        %1596 = vmatprep.subr.bf16.mxu0 0
        %1597 = vmatpush2.bf16.msra.mxu0 0
        %1598 = vmatprep.subr.bf16.mxu0 0
        %1599 = vmatpush2.bf16.msra.mxu0 0
        %1600 = vmatprep.subr.bf16.mxu0 0
        %1601 = vmatpush2.bf16.msra.mxu0 0
        %1602 = vmatprep.subr.bf16.mxu0 0
        %1603 = vmatpush2.bf16.msra.mxu0 0
        %1604 = vmatprep.subr.bf16.mxu0 0
        %1605 = vmatpush2.bf16.msra.mxu0 0
        %1606 = vmatprep.subr.bf16.mxu0 0
        %1607 = vmatpush2.bf16.msra.mxu0 0
        %1608 = vmatprep.subr.bf16.mxu0 0
        %1609 = vmatpush2.bf16.msra.mxu0 0
        %1610 = vmatprep.subr.bf16.mxu0 0
        %1611 = vmatpush2.bf16.msra.mxu0 0
        %1612 = vmatprep.mubr.bf16.mxu0 0
        %1613 = vmatmul.mubr.bf16.gmra.mxu0 %v1515
        %v1614 = vpop.f32.mrf.mxu0
        %v1615 = vadd.f32 0.0, %v1614
        %v1616 = vpop.f32.mrf.mxu0
        %v1617 = vpop.f32.mrf.mxu0
        %v1618 = vadd.f32 0.0, %v1617
        %v1619 = vpop.f32.mrf.mxu0
        %1620 = vdwg.mxu0
        %v1621 = vadd.f32 %v1507, %v1615
        %v1622 = vadd.f32 %v1510, %v1618
        %v1623 = vld [vmem:[#allocation3 + $0x360] sm:$0x1]
        %v1624 = vunpack.c.l.bf16 %v1623
        %v1625 = vlaneseq
        %v1626 = vshrl.u32 %v1625, 7
        %v1627 = vsub.s32 0, %v1626
        %v1628 = vrot.slane %v1624, %v1627
        %v1629 = vadd.f32 %v1621, %v1628
        %v1630 = vadd.f32 %v1622, %v1628
        %v1631 = vmax.f32 %v1629, 0.0
        %v1632 = vmax.f32 %v1630, 0.0
        %v1633 = vadd.f32 %v1631, %v955
        %v1634 = vadd.f32 %v1632, %v956
        %v1635 = vmax.f32 %v1633, 0.0
        %v1636 = vmax.f32 %v1634, 0.0
        %v1637 = vpack.c.bf16 %v1636, %v1635
        %v1638 = vld [vmem:[#allocation3 + $0x368] sm:$0xf]
        %v1639 = vld [vmem:[#allocation3 + $0x36c] sm:$0xf]
        %v1640 = vld [vmem:[#allocation3 + $0x370] sm:$0xf]
        %v1641 = vld [vmem:[#allocation3 + $0x374] sm:$0xf]
        %v1642 = vld [vmem:[#allocation3 + $0x378] sm:$0xf]
        %v1643 = vld [vmem:[#allocation3 + $0x37c] sm:$0xf]
        %v1644 = vld [vmem:[#allocation3 + $0x380] sm:$0xf]
        %v1645 = vld [vmem:[#allocation3 + $0x384] sm:$0xf]
        %v1646 = vld [vmem:[#allocation3 + $0x388] sm:$0xf]
        %v1647 = vld [vmem:[#allocation3 + $0x38c] sm:$0xf]
        %v1648 = vld [vmem:[#allocation3 + $0x390] sm:$0xf]
        %v1649 = vld [vmem:[#allocation3 + $0x394] sm:$0xf]
        %v1650 = vld [vmem:[#allocation3 + $0x398] sm:$0xf]
        %v1651 = vld [vmem:[#allocation3 + $0x39c] sm:$0xf]
        %v1652 = vld [vmem:[#allocation3 + $0x3a0] sm:$0xf]
        %v1653 = vld [vmem:[#allocation3 + $0x3a4] sm:$0xf]
        %v1654 = vld [vmem:[#allocation3 + $0x3a8] sm:$0x1]
        %v1655 = vunpack.c.l.bf16 %v1654
        %v1656 = vlaneseq
        %v1657 = vshrl.u32 %v1656, 7
        %v1658 = vsub.s32 0, %v1657
        %v1659 = vrot.slane %v1655, %v1658
        %v1676 = vunpack.c.l.b16 %v1638
        %v1677 = vunpack.c.l.b16 %v1639
        %v1678 = vunpack.c.l.b16 %v1640
        %v1679 = vunpack.c.l.b16 %v1641
        %v1680 = vunpack.c.l.b16 %v1642
        %v1681 = vunpack.c.l.b16 %v1643
        %v1682 = vunpack.c.l.b16 %v1644
        %v1683 = vunpack.c.l.b16 %v1645
        %v1684 = vunpack.c.l.b16 %v1646
        %v1685 = vunpack.c.l.b16 %v1647
        %v1686 = vunpack.c.l.b16 %v1648
        %v1687 = vunpack.c.l.b16 %v1649
        %v1688 = vunpack.c.l.b16 %v1650
        %v1689 = vunpack.c.l.b16 %v1651
        %v1690 = vunpack.c.l.b16 %v1652
        %v1691 = vunpack.c.l.b16 %v1653
        %v1692 = vpack.c.b16 %v1677, %v1676
        %v1693 = vpack.c.b16 %v1679, %v1678
        %v1694 = vpack.c.b16 %v1681, %v1680
        %v1695 = vpack.c.b16 %v1683, %v1682
        %v1696 = vpack.c.b16 %v1685, %v1684
        %v1697 = vpack.c.b16 %v1687, %v1686
        %v1698 = vpack.c.b16 %v1689, %v1688
        %v1699 = vpack.c.b16 %v1691, %v1690
        %1708 = vmatprep.subr.bf16.mxu0 0
        %1709 = vmatpush1.bf16.msra.mxu0 %v1699
        %1710 = vmatprep.subr.bf16.mxu0 0
        %1711 = vmatpush1.bf16.msra.mxu0 %v1698
        %1712 = vmatprep.subr.bf16.mxu0 0
        %1713 = vmatpush1.bf16.msra.mxu0 %v1697
        %1714 = vmatprep.subr.bf16.mxu0 0
        %1715 = vmatpush1.bf16.msra.mxu0 %v1696
        %1716 = vmatprep.subr.bf16.mxu0 0
        %1717 = vmatpush1.bf16.msra.mxu0 %v1695
        %1718 = vmatprep.subr.bf16.mxu0 0
        %1719 = vmatpush1.bf16.msra.mxu0 %v1694
        %1720 = vmatprep.subr.bf16.mxu0 0
        %1721 = vmatpush1.bf16.msra.mxu0 %v1693
        %1722 = vmatprep.subr.bf16.mxu0 0
        %1723 = vmatpush1.bf16.msra.mxu0 %v1692
        %1724 = vmatprep.subr.bf16.mxu0 0
        %1725 = vmatpush2.bf16.msra.mxu0 0
        %1726 = vmatprep.subr.bf16.mxu0 0
        %1727 = vmatpush2.bf16.msra.mxu0 0
        %1728 = vmatprep.subr.bf16.mxu0 0
        %1729 = vmatpush2.bf16.msra.mxu0 0
        %1730 = vmatprep.subr.bf16.mxu0 0
        %1731 = vmatpush2.bf16.msra.mxu0 0
        %1732 = vmatprep.subr.bf16.mxu0 0
        %1733 = vmatpush2.bf16.msra.mxu0 0
        %1734 = vmatprep.subr.bf16.mxu0 0
        %1735 = vmatpush2.bf16.msra.mxu0 0
        %1736 = vmatprep.subr.bf16.mxu0 0
        %1737 = vmatpush2.bf16.msra.mxu0 0
        %1738 = vmatprep.subr.bf16.mxu0 0
        %1739 = vmatpush2.bf16.msra.mxu0 0
        %1740 = vmatprep.mubr.bf16.mxu0 0
        %1741 = vmatmul.mubr.bf16.gmra.mxu0 %v1637
        %v1742 = vpop.f32.mrf.mxu0
        %v1743 = vadd.f32 %v1659, %v1742
        %v1744 = vpop.f32.mrf.mxu0
        %v1745 = vpop.f32.mrf.mxu0
        %v1746 = vadd.f32 %v1659, %v1745
        %v1747 = vpop.f32.mrf.mxu0
        %1748 = vdwg.mxu0
        %v1749 = vmax.f32 %v1743, 0.0
        %v1750 = vmax.f32 %v1746, 0.0
        %v1751 = vpack.c.bf16 %v1750, %v1749
        %v1752 = vld [vmem:[#allocation3 + $0x3b0] sm:$0xf]
        %v1753 = vld [vmem:[#allocation3 + $0x3b4] sm:$0xf]
        %v1754 = vld [vmem:[#allocation3 + $0x3b8] sm:$0xf]
        %v1755 = vld [vmem:[#allocation3 + $0x3bc] sm:$0xf]
        %v1756 = vld [vmem:[#allocation3 + $0x3c0] sm:$0xf]
        %v1757 = vld [vmem:[#allocation3 + $0x3c4] sm:$0xf]
        %v1758 = vld [vmem:[#allocation3 + $0x3c8] sm:$0xf]
        %v1759 = vld [vmem:[#allocation3 + $0x3cc] sm:$0xf]
        %v1760 = vld [vmem:[#allocation3 + $0x3d0] sm:$0xf]
        %v1761 = vld [vmem:[#allocation3 + $0x3d4] sm:$0xf]
        %v1762 = vld [vmem:[#allocation3 + $0x3d8] sm:$0xf]
        %v1763 = vld [vmem:[#allocation3 + $0x3dc] sm:$0xf]
        %v1764 = vld [vmem:[#allocation3 + $0x3e0] sm:$0xf]
        %v1765 = vld [vmem:[#allocation3 + $0x3e4] sm:$0xf]
        %v1766 = vld [vmem:[#allocation3 + $0x3e8] sm:$0xf]
        %v1767 = vld [vmem:[#allocation3 + $0x3ec] sm:$0xf]
        %v1768 = vld [vmem:[#allocation3 + $0x3f0] sm:$0x1]
        %v1769 = vunpack.c.l.bf16 %v1768
        %v1770 = vlaneseq
        %v1771 = vshrl.u32 %v1770, 7
        %v1772 = vsub.s32 0, %v1771
        %v1773 = vrot.slane %v1769, %v1772
        %v1790 = vunpack.c.l.b16 %v1752
        %v1791 = vunpack.c.l.b16 %v1753
        %v1792 = vunpack.c.l.b16 %v1754
        %v1793 = vunpack.c.l.b16 %v1755
        %v1794 = vunpack.c.l.b16 %v1756
        %v1795 = vunpack.c.l.b16 %v1757
        %v1796 = vunpack.c.l.b16 %v1758
        %v1797 = vunpack.c.l.b16 %v1759
        %v1798 = vunpack.c.l.b16 %v1760
        %v1799 = vunpack.c.l.b16 %v1761
        %v1800 = vunpack.c.l.b16 %v1762
        %v1801 = vunpack.c.l.b16 %v1763
        %v1802 = vunpack.c.l.b16 %v1764
        %v1803 = vunpack.c.l.b16 %v1765
        %v1804 = vunpack.c.l.b16 %v1766
        %v1805 = vunpack.c.l.b16 %v1767
        %v1806 = vpack.c.b16 %v1791, %v1790
        %v1807 = vpack.c.b16 %v1793, %v1792
        %v1808 = vpack.c.b16 %v1795, %v1794
        %v1809 = vpack.c.b16 %v1797, %v1796
        %v1810 = vpack.c.b16 %v1799, %v1798
        %v1811 = vpack.c.b16 %v1801, %v1800
        %v1812 = vpack.c.b16 %v1803, %v1802
        %v1813 = vpack.c.b16 %v1805, %v1804
        %1822 = vmatprep.subr.bf16.mxu0 0
        %1823 = vmatpush1.bf16.msra.mxu0 %v1813
        %1824 = vmatprep.subr.bf16.mxu0 0
        %1825 = vmatpush1.bf16.msra.mxu0 %v1812
        %1826 = vmatprep.subr.bf16.mxu0 0
        %1827 = vmatpush1.bf16.msra.mxu0 %v1811
        %1828 = vmatprep.subr.bf16.mxu0 0
        %1829 = vmatpush1.bf16.msra.mxu0 %v1810
        %1830 = vmatprep.subr.bf16.mxu0 0
        %1831 = vmatpush1.bf16.msra.mxu0 %v1809
        %1832 = vmatprep.subr.bf16.mxu0 0
        %1833 = vmatpush1.bf16.msra.mxu0 %v1808
        %1834 = vmatprep.subr.bf16.mxu0 0
        %1835 = vmatpush1.bf16.msra.mxu0 %v1807
        %1836 = vmatprep.subr.bf16.mxu0 0
        %1837 = vmatpush1.bf16.msra.mxu0 %v1806
        %1838 = vmatprep.subr.bf16.mxu0 0
        %1839 = vmatpush2.bf16.msra.mxu0 0
        %1840 = vmatprep.subr.bf16.mxu0 0
        %1841 = vmatpush2.bf16.msra.mxu0 0
        %1842 = vmatprep.subr.bf16.mxu0 0
        %1843 = vmatpush2.bf16.msra.mxu0 0
        %1844 = vmatprep.subr.bf16.mxu0 0
        %1845 = vmatpush2.bf16.msra.mxu0 0
        %1846 = vmatprep.subr.bf16.mxu0 0
        %1847 = vmatpush2.bf16.msra.mxu0 0
        %1848 = vmatprep.subr.bf16.mxu0 0
        %1849 = vmatpush2.bf16.msra.mxu0 0
        %1850 = vmatprep.subr.bf16.mxu0 0
        %1851 = vmatpush2.bf16.msra.mxu0 0
        %1852 = vmatprep.subr.bf16.mxu0 0
        %1853 = vmatpush2.bf16.msra.mxu0 0
        %1854 = vmatprep.mubr.bf16.mxu0 0
        %1855 = vmatmul.mubr.bf16.gmra.mxu0 %v1751
        %v1856 = vpop.f32.mrf.mxu0
        %v1857 = vadd.f32 %v1773, %v1856
        %v1858 = vpop.f32.mrf.mxu0
        %v1859 = vpop.f32.mrf.mxu0
        %v1860 = vadd.f32 %v1773, %v1859
        %v1861 = vpop.f32.mrf.mxu0
        %1862 = vdwg.mxu0
        %1863 = vst [vmem:[%s158] sm:$0xff] %v1857
        %1864 = vst [vmem:[%s158 + $0x8] sm:$0xff] %v1860
        %p1865 = scmp.lt.s32.totalorder %s14, 1
        %s1866 = scalar_select %p1865, %s14, 1
        %s1867 = smul.addr %s1866, 2
        %s1868 = smul.addr %s1867, 8
        %s1869 = scalar_lea.vmem %s2, %s1868
        // Predicated region
        $region33: #{tcn_deposit_forward.1} parent=27 // pred_check
          %p1870 = pneg %p79
        $region34: #{tcn_deposit_forward.1} parent=27 // pred_check_branch
          %1872 = sbr.rel (%p1870) target = $region36
        $region35: #{tcn_deposit_forward.1} parent=27 // pred_region
          _
        $region36: #{tcn_deposit_forward.1} parent=27 // pred_fallthru
          _
      $region28: #{tcn_deposit_forward.1} parent=5 // pred_fallthru
        _
      %p1873 = scmp.le.s32.totalorder 2, %s9
      // Predicated region
      $region37: #{tcn_deposit_forward.1} parent=5 // pred_check
        %p1874 = pneg %p1873
      $region38: #{tcn_deposit_forward.1} parent=5 // pred_check_branch
        %1876 = sbr.rel (%p1874) target = $region40
      $region39: #{tcn_deposit_forward.1} parent=5 // pred_region
        %s1877 = ssub.s32 %s9, 2
        // Predicated region
        $region41: #{tcn_deposit_forward.1} parent=39 // pred_check
          %p1878 = pneg %p85
        $region42: #{tcn_deposit_forward.1} parent=39 // pred_check_branch
          %1880 = sbr.rel (%p1878) target = $region44
        $region43: #{tcn_deposit_forward.1} parent=39 // pred_region
          %p1881 = scmp.lt.s32.totalorder %s15, 1
          %s1882 = scalar_select %p1881, %s15, 1
          %s1883 = smul.addr %s1882, 2
          %s1884 = smul.addr %s1883, 8
          %s1885 = scalar_lea.vmem %s2, %s1884
        $region44: #{tcn_deposit_forward.1} parent=39 // pred_fallthru
          _
      $region40: #{tcn_deposit_forward.1} parent=5 // pred_fallthru
        _
    $region6: #{tcn_deposit_forward.1} parent=1 // loop_footer
      %s13 = sadd.s32 1, %s9
    $region7: #{tcn_deposit_forward.1} parent=1 // loop_footer_branch
      %8 = sbr.rel target = $region3
    $region8: #{tcn_deposit_forward.1} parent=1 // loop_exit
      _
    %1886 = vsyncpa [#allocation4], 1
    %s1887 = scalar_lea.sflag [#allocation4], 1
    %1888 = vsyncpa %s1887, 1

</llo_original>
